<compile_context>
chip_gen: v7x
topology: tpu7x:2x2x1
jax: 0.10.0
libtpu: 0.0.40
codegen_flags: <defaults>
</compile_context>

<pallas_src>
import functools

import jax
import jax.numpy as jnp
from jax import lax
from jax.experimental import pallas as pl
from jax.experimental.pallas import tpu as pltpu

_BN_EPS = 1e-5


# ----------------------------------------------------------------------------
# In-register one-column shift with zero fill (replaces padded-scratch reads)
# ----------------------------------------------------------------------------
def _shift_cols(y, direction):
    """Shift a (R, W, C) slab by one column along axis 1 with zero fill.

    direction=+1: out[:, w] = y[:, w-1]  (zero at w == 0)     -> kw == 0 tap
    direction=-1: out[:, w] = y[:, w+1]  (zero at w == W-1)   -> kw == 2 tap

    Lowers to in-register sublane shifts; done once per kw instead of nine
    misaligned VMEM reads of a padded scratch.
    """
    R, W, C = y.shape
    zcol = jnp.zeros((R, 1, C), y.dtype)
    if direction == 1:
        return jnp.concatenate([zcol, y[:, :W - 1, :]], axis=1)
    return jnp.concatenate([y[:, 1:, :], zcol], axis=1)


# ----------------------------------------------------------------------------
# Fused Pallas kernel: one (batch image, output-row tile) per grid step
# ----------------------------------------------------------------------------
def _bottleneck_kernel(x_ref, w1_ref, b1_ref, a1_ref, w2_ref, b2_ref, a2_ref,
                       w3_ref, b3_ref, o_ref, *scratch, stride, connect):
    """x_ref: (H+2, W, Cin) zero-row-padded input image (resident across tiles).
    w1: (Cin, hidden)  [BN1 folded]   b1/a1: (1, hidden)
    w2: (3, 3, hidden) [BN2 folded]   b2/a2: (1, hidden)
    w3: (hidden, Cout) [BN3 folded]   b3:    (1, Cout)
    o_ref: (THo, Wo, Cout) output-row tile.
    scratch: () for stride==1, else ((THo-1)*stride+3, W+2, hidden) f32.
    """
    Hp, W, Cin = x_ref.shape
    H = Hp - 2
    hidden = w1_ref.shape[1]
    THo, Wo, Cout = o_ref.shape
    TH_in = (THo - 1) * stride + 3          # y1 rows (incl. 3x3 halo) this tile

    h = pl.program_id(1)
    r0 = h * (THo * stride)                 # first padded-coord row needed
    if (THo * stride) % 8 == 0:
        r0 = pl.multiple_of(r0, 8)

    # ---- stage 1: 1x1 expand (MXU) + BN bias + PReLU on the row strip -------
    xa = x_ref[pl.ds(r0, TH_in), :, :]                      # (TH_in, W, Cin)
    y1 = jnp.dot(xa.reshape(TH_in * W, Cin).astype(w1_ref.dtype), w1_ref[...],
                 preferred_element_type=jnp.float32)
    y1 = y1 + b1_ref[...]
    y1 = jnp.where(y1 >= 0.0, y1, a1_ref[...] * y1)         # PReLU
    y1 = y1.reshape(TH_in, W, hidden)

    # Rows that sit on the depthwise 3x3 zero padding (padded coords 0 / H+1)
    # must be zero *after* BN/PReLU.  Only the first / last row tile has any.
    row = r0 + lax.broadcasted_iota(jnp.int32, (TH_in, 1, 1), 0)
    y1 = jnp.where((row >= 1) & (row <= H), y1, 0.0)

    w2 = w2_ref[...]                                        # (3, 3, hidden) f32
    b2 = b2_ref[0]                                          # (hidden,)

    # ---- stage 2: depthwise 3x3, padding 1 -----------------------------------
    if stride == 1:
        # Column taps via two one-column shifts (zero-filled); row taps are
        # cheap outer-axis slices.  No padded scratch / VMEM round trip.
        taps = (_shift_cols(y1, +1), y1, _shift_cols(y1, -1))
        acc = taps[0][0:THo] * w2[0, 0] + b2                # 1st tap + folded bias
        for kh in range(3):
            for kw in range(3):
                if kh == 0 and kw == 0:
                    continue
                acc = acc + taps[kw][kh:kh + THo] * w2[kh, kw]
    else:
        # Zero-padded VMEM scratch; taps read directly at output resolution
        # with strided slices.  Only the 1-column borders are zeroed per step;
        # the interior (rows already masked) is fully rewritten.
        ypad = scratch[0]                                   # (TH_in, W+2, hidden)
        ypad[:, 0:1, :] = jnp.zeros((TH_in, 1, hidden), jnp.float32)
        ypad[:, W + 1:W + 2, :] = jnp.zeros((TH_in, 1, hidden), jnp.float32)
        ypad[:, pl.ds(1, W), :] = y1
        acc = (ypad[pl.ds(0, THo, stride=stride),
                    pl.ds(0, Wo, stride=stride), :] * w2[0, 0] + b2)
        for kh in range(3):
            for kw in range(3):
                if kh == 0 and kw == 0:
                    continue
                acc = acc + ypad[pl.ds(kh, THo, stride=stride),
                                 pl.ds(kw, Wo, stride=stride), :] * w2[kh, kw]

    y2 = jnp.where(acc >= 0.0, acc, a2_ref[0] * acc)        # PReLU

    # ---- stage 3: 1x1 project (MXU) + BN bias (+ residual) -------------------
    y3 = jnp.dot(y2.reshape(THo * Wo, hidden).astype(w3_ref.dtype), w3_ref[...],
                 preferred_element_type=jnp.float32)
    y3 = y3 + b3_ref[...]
    if connect:                                             # stride==1, Cin==Cout
        xres = xa[1:THo + 1]                                # this tile's own rows
        y3 = y3 + xres.reshape(THo * Wo, Cin).astype(jnp.float32)
    o_ref[...] = y3.reshape(THo, Wo, Cout).astype(o_ref.dtype)


# ----------------------------------------------------------------------------
# Wrappers
# ----------------------------------------------------------------------------
def _fold_bn(gamma, beta, mean, var):
    scale = gamma / jnp.sqrt(var + _BN_EPS)
    return scale, beta - mean * scale


def _pick_tile_rows(ho, target):
    """Largest divisor of `ho` that is <= target (whole image if ho is awkward)."""
    target = max(1, min(ho, target))
    for t in range(target, 0, -1):
        if ho % t == 0:
            return t if 2 * t >= target else ho
    return ho


def bottleneck_forward_nhwc(x, p, *, stride, connect, compute_dtype=jnp.float32,
                            tile_rows=8):
    """NHWC Bottleneck forward. x: (N, H, W, Cin). Preferred entry point."""
    N, H, W, Cin = x.shape
    hidden = p["w1"].shape[0]
    Cout = p["w3"].shape[0]
    Ho = (H - 1) // stride + 1
    Wo = (W - 1) // stride + 1
    if connect:
        assert stride == 1 and Cin == Cout

    THo = _pick_tile_rows(Ho, tile_rows)
    assert Ho % THo == 0
    n_h = Ho // THo
    TH_in = (THo - 1) * stride + 3
    Hp = H + 2

    # Fold inference-mode BN into conv weights; kernel only adds per-ch biases.
    s1, b1 = _fold_bn(*p["bn1"])
    s2, b2 = _fold_bn(*p["bn2"])
    s3, b3 = _fold_bn(*p["bn3"])
    w1 = (p["w1"][:, :, 0, 0].T * s1[None, :]).astype(compute_dtype)        # (Cin, hidden)
    w2 = (jnp.transpose(p["w2"][:, 0, :, :], (1, 2, 0)) *
          s2[None, None, :]).astype(jnp.float32)                            # (3, 3, hidden)
    w3 = (p["w3"][:, :, 0, 0].T * s3[None, :]).astype(compute_dtype)        # (hidden, Cout)
    b1 = b1[None, :].astype(jnp.float32)
    b2 = b2[None, :].astype(jnp.float32)
    b3 = b3[None, :].astype(jnp.float32)
    a1 = p["a1"][None, :].astype(jnp.float32)
    a2 = p["a2"][None, :].astype(jnp.float32)

    # bf16 activations in HBM on the bf16-MXU path (v6e/v7x): halves act DMA
    # bytes and block VMEM footprint; BN/PReLU/stencil math stays f32.
    act_dtype = jnp.bfloat16 if compute_dtype == jnp.bfloat16 else x.dtype
    # One cheap zero pad of the channel-thin input rows: every row tile's halo
    # read is then in-bounds, with no clamping/shifting inside the kernel.
    xp = jnp.pad(x, ((0, 0), (1, 1), (0, 0), (0, 0))).astype(act_dtype)

    scratch = ([] if stride == 1
               else [pltpu.VMEM((TH_in, W + 2, hidden), jnp.float32)])

    # Explicit scoped-VMEM limit (v5e default is only 16 MiB), with headroom.
    a_bytes = jnp.dtype(act_dtype).itemsize
    c_bytes = jnp.dtype(compute_dtype).itemsize
    est = (2 * Hp * W * Cin * a_bytes                       # resident input (x2 buf)
           + 2 * THo * Wo * Cout * a_bytes                  # output block  (x2 buf)
           + 2 * ((Cin + Cout) * hidden * c_bytes + (13 * hidden + Cout) * 4)
           + (TH_in * (W + 2) * hidden * 4 if stride != 1 else 0)
           + 6 * TH_in * W * hidden * 4)                    # live y1 / taps / acc
    vmem_limit = int(min(max(2 * est, 32 * 1024 * 1024), 56 * 1024 * 1024))

    kernel = functools.partial(_bottleneck_kernel, stride=stride, connect=connect)

    return pl.pallas_call(
        kernel,
        out_shape=jax.ShapeDtypeStruct((N, Ho, Wo, Cout), act_dtype),
        grid_spec=pltpu.PrefetchScalarGridSpec(
            num_scalar_prefetch=0,
            grid=(N, n_h),
            in_specs=[
                # Whole padded image; same block for every h -> stays resident.
                pl.BlockSpec((None, Hp, W, Cin), lambda b, h: (b, 0, 0, 0)),
                pl.BlockSpec((Cin, hidden), lambda b, h: (0, 0)),
                pl.BlockSpec((1, hidden), lambda b, h: (0, 0)),
                pl.BlockSpec((1, hidden), lambda b, h: (0, 0)),
                pl.BlockSpec((3, 3, hidden), lambda b, h: (0, 0, 0)),
                pl.BlockSpec((1, hidden), lambda b, h: (0, 0)),
                pl.BlockSpec((1, hidden), lambda b, h: (0, 0)),
                pl.BlockSpec((hidden, Cout), lambda b, h: (0, 0)),
                pl.BlockSpec((1, Cout), lambda b, h: (0, 0)),
            ],
            out_specs=pl.BlockSpec((None, THo, Wo, Cout),
                                   lambda b, h: (b, h, 0, 0)),
            scratch_shapes=scratch,
        ),
        compiler_params=pltpu.CompilerParams(
            dimension_semantics=("parallel", "parallel"),
            vmem_limit_bytes=vmem_limit),
    )(xp, w1, b1, a1, w2, b2, a2, w3, b3)


def bottleneck_forward(x_nchw, p, *, stride, connect, compute_dtype=jnp.float32,
                       tile_rows=8):
    """NCHW wrapper matching the PyTorch module interface.

    NOTE: a full NHWC network should call bottleneck_forward_nhwc directly and
    skip these two full-tensor transposes.
    """
    x = jnp.transpose(x_nchw, (0, 2, 3, 1))
    y = bottleneck_forward_nhwc(x, p, stride=stride, connect=connect,
                                compute_dtype=compute_dtype, tile_rows=tile_rows)
    return jnp.transpose(y, (0, 3, 1, 2))


# ----------------------------------------------------------------------------
# Pure-JAX reference (same math, lax convolutions) for verification
# ----------------------------------------------------------------------------
def _ref_forward(x, p, stride, connect):
    def bn(y, g, b, m, v):
        inv = g / jnp.sqrt(v + _BN_EPS)
        return y * inv[None, :, None, None] + (b - m * inv)[None, :, None, None]

    def prelu(y, a):
        return jnp.where(y >= 0, y, a[None, :, None, None] * y)

    dn = ("NCHW", "OIHW", "NCHW")
    y = lax.conv_general_dilated(x, p["w1"], (1, 1), "VALID", dimension_numbers=dn)
    y = prelu(bn(y, *p["bn1"]), p["a1"])
    y = lax.conv_general_dilated(y, p["w2"], (stride, stride), ((1, 1), (1, 1)),
                                 dimension_numbers=dn,
                                 feature_group_count=p["w2"].shape[0])
    y = prelu(bn(y, *p["bn2"]), p["a2"])
    y = lax.conv_general_dilated(y, p["w3"], (1, 1), "VALID", dimension_numbers=dn)
    y = bn(y, *p["bn3"])
    return x + y if connect else y


# ----------------------------------------------------------------------------
# Deterministic parameter init (matches nn.Module __init__ shapes)
# ----------------------------------------------------------------------------
def init_params(key, inp, oup, expansion):
    hidden = inp * expansion
    ks = jax.random.split(key, 17)

    def bn_params(k0, k1, k2, k3, c):
        g = 1.0 + 0.1 * jax.random.normal(k0, (c,), jnp.float32)
        b = 0.1 * jax.random.normal(k1, (c,), jnp.float32)
        m = 0.1 * jax.random.normal(k2, (c,), jnp.float32)
        v = 0.5 + 0.5 * jnp.abs(jax.random.normal(k3, (c,), jnp.float32))
        return (g, b, m, v)

    return {
        "w1": 0.1 * jax.random.normal(ks[0], (hidden, inp, 1, 1), jnp.float32),
        "bn1": bn_params(ks[1], ks[2], ks[3], ks[4], hidden),
        "a1": 0.25 + 0.05 * jax.random.normal(ks[5], (hidden,), jnp.float32),
        "w2": 0.1 * jax.random.normal(ks[6], (hidden, 1, 3, 3), jnp.float32),
        "bn2": bn_params(ks[7], ks[8], ks[9], ks[10], hidden),
        "a2": 0.25 + 0.05 * jax.random.normal(ks[11], (hidden,), jnp.float32),
        "w3": 0.1 * jax.random.normal(ks[12], (oup, hidden, 1, 1), jnp.float32),
        "bn3": bn_params(ks[13], ks[14], ks[15], ks[16], oup),
    }


if __name__ == "__main__":
    key = jax.random.PRNGKey(0)
    k_x, k_p, k_p2 = jax.random.split(key, 3)

    # Case 1: Bottleneck(inp=4, oup=4, stride=1, expansion=2) -> residual path,
    # shift-based stencil, 2 row tiles per image (Ho=16, THo=8).
    inp, oup, stride, expansion = 4, 4, 1, 2
    connect = (stride == 1) and (inp == oup)
    x = jax.random.normal(k_x, (2, inp, 16, 16), jnp.float32)        # NCHW
    params = init_params(k_p, inp, oup, expansion)
    ref = _ref_forward(x, params, stride, connect)

    fwd_f32 = jax.jit(functools.partial(
        bottleneck_forward, stride=stride, connect=connect,
        compute_dtype=jnp.float32))
    out_f32 = jax.block_until_ready(fwd_f32(x, params))
    assert out_f32.shape == ref.shape, (out_f32.shape, ref.shape)
    assert jnp.allclose(out_f32, ref, atol=1e-4, rtol=1e-4), \
        float(jnp.max(jnp.abs(out_f32 - ref)))

    # Case 2: Bottleneck(inp=4, oup=8, stride=2, expansion=2) -> no residual,
    # zero-padded scratch + strided taps, 2 row tiles (Ho=8, THo=4).
    params2 = init_params(k_p2, inp, 8, expansion)
    ref2 = _ref_forward(x, params2, 2, False)
    fwd_s2 = jax.jit(functools.partial(
        bottleneck_forward, stride=2, connect=False,
        compute_dtype=jnp.float32, tile_rows=4))
    out_s2 = jax.block_until_ready(fwd_s2(x, params2))
    assert out_s2.shape == ref2.shape, (out_s2.shape, ref2.shape)
    assert jnp.allclose(out_s2, ref2, atol=1e-4, rtol=1e-4), \
        float(jnp.max(jnp.abs(out_s2 - ref2)))

    # Case 3: bf16 activations in HBM + bf16 MXU operands (v6e/v7x path);
    # BN/PReLU/stencil math and accumulation stay f32.
    fwd_bf16 = jax.jit(functools.partial(
        bottleneck_forward, stride=stride, connect=connect,
        compute_dtype=jnp.bfloat16))
    out_bf16 = jax.block_until_ready(fwd_bf16(x, params))
    assert out_bf16.shape == ref.shape, (out_bf16.shape, ref.shape)
    assert jnp.allclose(out_bf16.astype(jnp.float32), ref, atol=1e-1, rtol=1e-1), \
        float(jnp.max(jnp.abs(out_bf16.astype(jnp.float32) - ref)))

    print("KERNEL_OK")
</pallas_src>

<mosaic_0001>
module attributes {stable_mosaic.version = 11 : i64} {
  func.func @_bottleneck_kernel(%arg0: i32, %arg1: i32, %arg2: memref<1x18x16x4xf32, #tpu.memory_space<vmem>>, %arg3: memref<4x8xf32, #tpu.memory_space<vmem>>, %arg4: memref<1x8xf32, #tpu.memory_space<vmem>>, %arg5: memref<1x8xf32, #tpu.memory_space<vmem>>, %arg6: memref<3x3x8xf32, #tpu.memory_space<vmem>>, %arg7: memref<1x8xf32, #tpu.memory_space<vmem>>, %arg8: memref<1x8xf32, #tpu.memory_space<vmem>>, %arg9: memref<8x4xf32, #tpu.memory_space<vmem>>, %arg10: memref<1x4xf32, #tpu.memory_space<vmem>>, %arg11: memref<1x8x16x4xf32, #tpu.memory_space<vmem>>) attributes {dimension_semantics = [#tpu.dimension_semantics<parallel>, #tpu.dimension_semantics<parallel>], iteration_bounds = array<i64: 2, 2>, scalar_prefetch = 0 : i64, scratch_operands = 0 : i64, tpu.core_type = #tpu.core_type<tc>, window_params = [{transform_indices = @transform_0, window_bounds = array<i64: 1, 18, 16, 4>}, {pipeline_mode = #tpu.pipeline_mode<synchronous>, transform_indices = @transform_1, window_bounds = array<i64: 4, 8>}, {pipeline_mode = #tpu.pipeline_mode<synchronous>, transform_indices = @transform_2, window_bounds = array<i64: 1, 8>}, {pipeline_mode = #tpu.pipeline_mode<synchronous>, transform_indices = @transform_3, window_bounds = array<i64: 1, 8>}, {pipeline_mode = #tpu.pipeline_mode<synchronous>, transform_indices = @transform_4, window_bounds = array<i64: 3, 3, 8>}, {pipeline_mode = #tpu.pipeline_mode<synchronous>, transform_indices = @transform_5, window_bounds = array<i64: 1, 8>}, {pipeline_mode = #tpu.pipeline_mode<synchronous>, transform_indices = @transform_6, window_bounds = array<i64: 1, 8>}, {pipeline_mode = #tpu.pipeline_mode<synchronous>, transform_indices = @transform_7, window_bounds = array<i64: 8, 4>}, {pipeline_mode = #tpu.pipeline_mode<synchronous>, transform_indices = @transform_8, window_bounds = array<i64: 1, 4>}, {transform_indices = @transform_9, window_bounds = array<i64: 1, 8, 16, 4>}]} {
    %c8_i32 = arith.constant 8 : i32
    %0 = arith.muli %arg1, %c8_i32 : i32
    %1 = tpu.assume_multiple %0, 8 : i32
    %c0 = arith.constant 0 : index
    %2 = arith.index_cast %1 : i32 to index
    %c0_0 = arith.constant 0 : index
    %c0_1 = arith.constant 0 : index
    %3 = vector.load %arg2[%c0, %2, %c0_0, %c0_1] : memref<1x18x16x4xf32, #tpu.memory_space<vmem>>, vector<1x10x16x4xf32>
    %4 = vector.shape_cast %3 : vector<1x10x16x4xf32> to vector<10x16x4xf32>
    %5 = vector.shape_cast %4 : vector<10x16x4xf32> to vector<160x4xf32>
    %c0_2 = arith.constant 0 : index
    %c0_3 = arith.constant 0 : index
    %6 = vector.load %arg3[%c0_2, %c0_3] : memref<4x8xf32, #tpu.memory_space<vmem>>, vector<4x8xf32>
    %cst = arith.constant dense<0.000000e+00> : vector<160x8xf32>
    %7 = tpu.matmul %5, %6, %cst {dimension_numbers = #tpu.dot_dimension_numbers<[1], [0], [0], [1], [0, 0, 1, 1], [], []>} : vector<160x4xf32>, vector<4x8xf32>, vector<160x8xf32> -> vector<160x8xf32>
    %c0_4 = arith.constant 0 : index
    %c0_5 = arith.constant 0 : index
    %8 = vector.load %arg4[%c0_4, %c0_5] : memref<1x8xf32, #tpu.memory_space<vmem>>, vector<1x8xf32>
    %9 = vector.broadcast %8 : vector<1x8xf32> to vector<160x8xf32>
    %10 = arith.addf %7, %9 : vector<160x8xf32>
    %cst_6 = arith.constant 0.000000e+00 : f32
    %11 = vector.broadcast %cst_6 : f32 to vector<160x8xf32>
    %12 = arith.cmpf oge, %10, %11 : vector<160x8xf32>
    %c0_7 = arith.constant 0 : index
    %c0_8 = arith.constant 0 : index
    %13 = vector.load %arg5[%c0_7, %c0_8] : memref<1x8xf32, #tpu.memory_space<vmem>>, vector<1x8xf32>
    %14 = vector.broadcast %13 : vector<1x8xf32> to vector<160x8xf32>
    %15 = arith.mulf %14, %10 : vector<160x8xf32>
    %16 = arith.select %12, %10, %15 : vector<160x8xi1>, vector<160x8xf32>
    %17 = vector.shape_cast %16 : vector<160x8xf32> to vector<10x16x8xf32>
    %18 = tpu.iota {dimensions = array<i32: 0>} : vector<10x1x1xi32>
    %19 = vector.broadcast %1 : i32 to vector<10x1x1xi32>
    %20 = arith.addi %19, %18 : vector<10x1x1xi32>
    %c1_i32 = arith.constant 1 : i32
    %21 = vector.broadcast %c1_i32 : i32 to vector<10x1x1xi32>
    %22 = arith.cmpi sge, %20, %21 : vector<10x1x1xi32>
    %c16_i32 = arith.constant 16 : i32
    %23 = vector.broadcast %c16_i32 : i32 to vector<10x1x1xi32>
    %24 = arith.cmpi sle, %20, %23 : vector<10x1x1xi32>
    %25 = arith.andi %22, %24 : vector<10x1x1xi1>
    %cst_9 = arith.constant 0.000000e+00 : f32
    %26 = vector.shape_cast %25 : vector<10x1x1xi1> to vector<10x1x1xi1>
    %27 = vector.broadcast %26 : vector<10x1x1xi1> to vector<10x16x8xi1>
    %28 = vector.broadcast %cst_9 : f32 to vector<10x16x8xf32>
    %29 = arith.select %27, %17, %28 : vector<10x16x8xi1>, vector<10x16x8xf32>
    %c0_10 = arith.constant 0 : index
    %c0_11 = arith.constant 0 : index
    %c0_12 = arith.constant 0 : index
    %30 = vector.load %arg6[%c0_10, %c0_11, %c0_12] : memref<3x3x8xf32, #tpu.memory_space<vmem>>, vector<3x3x8xf32>
    %c0_13 = arith.constant 0 : index
    %c0_14 = arith.constant 0 : index
    %31 = vector.load %arg7[%c0_13, %c0_14] : memref<1x8xf32, #tpu.memory_space<vmem>>, vector<1x8xf32>
    %32 = vector.shape_cast %31 : vector<1x8xf32> to vector<8xf32>
    %cst_15 = arith.constant 0.000000e+00 : f32
    %33 = vector.broadcast %cst_15 : f32 to vector<10x1x8xf32>
    %34 = vector.extract_strided_slice %29 {offsets = [0, 0, 0], sizes = [10, 15, 8], strides = [1, 1, 1]} : vector<10x16x8xf32> to vector<10x15x8xf32>
    %35 = tpu.concatenate %33, %34 in 1 : vector<10x1x8xf32>, vector<10x15x8xf32> -> vector<10x16x8xf32>
    %cst_16 = arith.constant 0.000000e+00 : f32
    %36 = vector.broadcast %cst_16 : f32 to vector<10x1x8xf32>
    %37 = vector.extract_strided_slice %29 {offsets = [0, 1, 0], sizes = [10, 15, 8], strides = [1, 1, 1]} : vector<10x16x8xf32> to vector<10x15x8xf32>
    %38 = tpu.concatenate %37, %36 in 1 : vector<10x15x8xf32>, vector<10x1x8xf32> -> vector<10x16x8xf32>
    %39 = vector.extract_strided_slice %35 {offsets = [0, 0, 0], sizes = [8, 16, 8], strides = [1, 1, 1]} : vector<10x16x8xf32> to vector<8x16x8xf32>
    %40 = vector.extract_strided_slice %30 {offsets = [0, 0, 0], sizes = [1, 1, 8], strides = [1, 1, 1]} : vector<3x3x8xf32> to vector<1x1x8xf32>
    %41 = vector.shape_cast %40 : vector<1x1x8xf32> to vector<8xf32>
    %42 = vector.shape_cast %41 : vector<8xf32> to vector<1x1x8xf32>
    %43 = vector.broadcast %42 : vector<1x1x8xf32> to vector<8x16x8xf32>
    %44 = arith.mulf %39, %43 : vector<8x16x8xf32>
    %45 = vector.shape_cast %32 : vector<8xf32> to vector<1x1x8xf32>
    %46 = vector.broadcast %45 : vector<1x1x8xf32> to vector<8x16x8xf32>
    %47 = arith.addf %44, %46 : vector<8x16x8xf32>
    %48 = vector.extract_strided_slice %29 {offsets = [0, 0, 0], sizes = [8, 16, 8], strides = [1, 1, 1]} : vector<10x16x8xf32> to vector<8x16x8xf32>
    %49 = vector.extract_strided_slice %30 {offsets = [0, 1, 0], sizes = [1, 1, 8], strides = [1, 1, 1]} : vector<3x3x8xf32> to vector<1x1x8xf32>
    %50 = vector.shape_cast %49 : vector<1x1x8xf32> to vector<8xf32>
    %51 = vector.shape_cast %50 : vector<8xf32> to vector<1x1x8xf32>
    %52 = vector.broadcast %51 : vector<1x1x8xf32> to vector<8x16x8xf32>
    %53 = arith.mulf %48, %52 : vector<8x16x8xf32>
    %54 = arith.addf %47, %53 : vector<8x16x8xf32>
    %55 = vector.extract_strided_slice %38 {offsets = [0, 0, 0], sizes = [8, 16, 8], strides = [1, 1, 1]} : vector<10x16x8xf32> to vector<8x16x8xf32>
    %56 = vector.extract_strided_slice %30 {offsets = [0, 2, 0], sizes = [1, 1, 8], strides = [1, 1, 1]} : vector<3x3x8xf32> to vector<1x1x8xf32>
    %57 = vector.shape_cast %56 : vector<1x1x8xf32> to vector<8xf32>
    %58 = vector.shape_cast %57 : vector<8xf32> to vector<1x1x8xf32>
    %59 = vector.broadcast %58 : vector<1x1x8xf32> to vector<8x16x8xf32>
    %60 = arith.mulf %55, %59 : vector<8x16x8xf32>
    %61 = arith.addf %54, %60 : vector<8x16x8xf32>
    %62 = vector.extract_strided_slice %35 {offsets = [1, 0, 0], sizes = [8, 16, 8], strides = [1, 1, 1]} : vector<10x16x8xf32> to vector<8x16x8xf32>
    %63 = vector.extract_strided_slice %30 {offsets = [1, 0, 0], sizes = [1, 1, 8], strides = [1, 1, 1]} : vector<3x3x8xf32> to vector<1x1x8xf32>
    %64 = vector.shape_cast %63 : vector<1x1x8xf32> to vector<8xf32>
    %65 = vector.shape_cast %64 : vector<8xf32> to vector<1x1x8xf32>
    %66 = vector.broadcast %65 : vector<1x1x8xf32> to vector<8x16x8xf32>
    %67 = arith.mulf %62, %66 : vector<8x16x8xf32>
    %68 = arith.addf %61, %67 : vector<8x16x8xf32>
    %69 = vector.extract_strided_slice %29 {offsets = [1, 0, 0], sizes = [8, 16, 8], strides = [1, 1, 1]} : vector<10x16x8xf32> to vector<8x16x8xf32>
    %70 = vector.extract_strided_slice %30 {offsets = [1, 1, 0], sizes = [1, 1, 8], strides = [1, 1, 1]} : vector<3x3x8xf32> to vector<1x1x8xf32>
    %71 = vector.shape_cast %70 : vector<1x1x8xf32> to vector<8xf32>
    %72 = vector.shape_cast %71 : vector<8xf32> to vector<1x1x8xf32>
    %73 = vector.broadcast %72 : vector<1x1x8xf32> to vector<8x16x8xf32>
    %74 = arith.mulf %69, %73 : vector<8x16x8xf32>
    %75 = arith.addf %68, %74 : vector<8x16x8xf32>
    %76 = vector.extract_strided_slice %38 {offsets = [1, 0, 0], sizes = [8, 16, 8], strides = [1, 1, 1]} : vector<10x16x8xf32> to vector<8x16x8xf32>
    %77 = vector.extract_strided_slice %30 {offsets = [1, 2, 0], sizes = [1, 1, 8], strides = [1, 1, 1]} : vector<3x3x8xf32> to vector<1x1x8xf32>
    %78 = vector.shape_cast %77 : vector<1x1x8xf32> to vector<8xf32>
    %79 = vector.shape_cast %78 : vector<8xf32> to vector<1x1x8xf32>
    %80 = vector.broadcast %79 : vector<1x1x8xf32> to vector<8x16x8xf32>
    %81 = arith.mulf %76, %80 : vector<8x16x8xf32>
    %82 = arith.addf %75, %81 : vector<8x16x8xf32>
    %83 = vector.extract_strided_slice %35 {offsets = [2, 0, 0], sizes = [8, 16, 8], strides = [1, 1, 1]} : vector<10x16x8xf32> to vector<8x16x8xf32>
    %84 = vector.extract_strided_slice %30 {offsets = [2, 0, 0], sizes = [1, 1, 8], strides = [1, 1, 1]} : vector<3x3x8xf32> to vector<1x1x8xf32>
    %85 = vector.shape_cast %84 : vector<1x1x8xf32> to vector<8xf32>
    %86 = vector.shape_cast %85 : vector<8xf32> to vector<1x1x8xf32>
    %87 = vector.broadcast %86 : vector<1x1x8xf32> to vector<8x16x8xf32>
    %88 = arith.mulf %83, %87 : vector<8x16x8xf32>
    %89 = arith.addf %82, %88 : vector<8x16x8xf32>
    %90 = vector.extract_strided_slice %29 {offsets = [2, 0, 0], sizes = [8, 16, 8], strides = [1, 1, 1]} : vector<10x16x8xf32> to vector<8x16x8xf32>
    %91 = vector.extract_strided_slice %30 {offsets = [2, 1, 0], sizes = [1, 1, 8], strides = [1, 1, 1]} : vector<3x3x8xf32> to vector<1x1x8xf32>
    %92 = vector.shape_cast %91 : vector<1x1x8xf32> to vector<8xf32>
    %93 = vector.shape_cast %92 : vector<8xf32> to vector<1x1x8xf32>
    %94 = vector.broadcast %93 : vector<1x1x8xf32> to vector<8x16x8xf32>
    %95 = arith.mulf %90, %94 : vector<8x16x8xf32>
    %96 = arith.addf %89, %95 : vector<8x16x8xf32>
    %97 = vector.extract_strided_slice %38 {offsets = [2, 0, 0], sizes = [8, 16, 8], strides = [1, 1, 1]} : vector<10x16x8xf32> to vector<8x16x8xf32>
    %98 = vector.extract_strided_slice %30 {offsets = [2, 2, 0], sizes = [1, 1, 8], strides = [1, 1, 1]} : vector<3x3x8xf32> to vector<1x1x8xf32>
    %99 = vector.shape_cast %98 : vector<1x1x8xf32> to vector<8xf32>
    %100 = vector.shape_cast %99 : vector<8xf32> to vector<1x1x8xf32>
    %101 = vector.broadcast %100 : vector<1x1x8xf32> to vector<8x16x8xf32>
    %102 = arith.mulf %97, %101 : vector<8x16x8xf32>
    %103 = arith.addf %96, %102 : vector<8x16x8xf32>
    %cst_17 = arith.constant 0.000000e+00 : f32
    %104 = vector.broadcast %cst_17 : f32 to vector<8x16x8xf32>
    %105 = arith.cmpf oge, %103, %104 : vector<8x16x8xf32>
    %c0_18 = arith.constant 0 : index
    %c0_19 = arith.constant 0 : index
    %106 = vector.load %arg8[%c0_18, %c0_19] : memref<1x8xf32, #tpu.memory_space<vmem>>, vector<1x8xf32>
    %107 = vector.shape_cast %106 : vector<1x8xf32> to vector<8xf32>
    %108 = vector.shape_cast %107 : vector<8xf32> to vector<1x1x8xf32>
    %109 = vector.broadcast %108 : vector<1x1x8xf32> to vector<8x16x8xf32>
    %110 = arith.mulf %109, %103 : vector<8x16x8xf32>
    %111 = arith.select %105, %103, %110 : vector<8x16x8xi1>, vector<8x16x8xf32>
    %112 = vector.shape_cast %111 : vector<8x16x8xf32> to vector<128x8xf32>
    %c0_20 = arith.constant 0 : index
    %c0_21 = arith.constant 0 : index
    %113 = vector.load %arg9[%c0_20, %c0_21] : memref<8x4xf32, #tpu.memory_space<vmem>>, vector<8x4xf32>
    %cst_22 = arith.constant dense<0.000000e+00> : vector<128x4xf32>
    %114 = tpu.matmul %112, %113, %cst_22 {dimension_numbers = #tpu.dot_dimension_numbers<[1], [0], [0], [1], [0, 0, 1, 1], [], []>} : vector<128x8xf32>, vector<8x4xf32>, vector<128x4xf32> -> vector<128x4xf32>
    %c0_23 = arith.constant 0 : index
    %c0_24 = arith.constant 0 : index
    %115 = vector.load %arg10[%c0_23, %c0_24] : memref<1x4xf32, #tpu.memory_space<vmem>>, vector<1x4xf32>
    %116 = vector.broadcast %115 : vector<1x4xf32> to vector<128x4xf32>
    %117 = arith.addf %114, %116 : vector<128x4xf32>
    %118 = vector.extract_strided_slice %4 {offsets = [1, 0, 0], sizes = [8, 16, 4], strides = [1, 1, 1]} : vector<10x16x4xf32> to vector<8x16x4xf32>
    %119 = vector.shape_cast %118 : vector<8x16x4xf32> to vector<128x4xf32>
    %120 = arith.addf %117, %119 : vector<128x4xf32>
    %121 = vector.shape_cast %120 : vector<128x4xf32> to vector<8x16x4xf32>
    %c0_25 = arith.constant 0 : index
    %c0_26 = arith.constant 0 : index
    %c0_27 = arith.constant 0 : index
    %c0_28 = arith.constant 0 : index
    %122 = vector.load %arg11[%c0_25, %c0_26, %c0_27, %c0_28] : memref<1x8x16x4xf32, #tpu.memory_space<vmem>>, vector<1x8x16x4xf32>
    %123 = vector.shape_cast %122 : vector<1x8x16x4xf32> to vector<8x16x4xf32>
    %124 = vector.shape_cast %121 : vector<8x16x4xf32> to vector<1x8x16x4xf32>
    tpu.vector_store %arg11[%c0_25, %c0_26, %c0_27, %c0_28], %124 {strides = array<i32>} : memref<1x8x16x4xf32, #tpu.memory_space<vmem>>, vector<1x8x16x4xf32>,
    return
  }
  func.func @transform_0(%arg0: i32, %arg1: i32) -> (i32, i32, i32, i32) {
    %c0_i32 = arith.constant 0 : i32
    %c0_i32_0 = arith.constant 0 : i32
    %c0_i32_1 = arith.constant 0 : i32
    %c0_i32_2 = arith.constant 0 : i32
    return %arg0, %c0_i32, %c0_i32_0, %c0_i32_1 : i32, i32, i32, i32
  }
  func.func @transform_1(%arg0: i32, %arg1: i32) -> (i32, i32) {
    %c0_i32 = arith.constant 0 : i32
    %c0_i32_0 = arith.constant 0 : i32
    %c0_i32_1 = arith.constant 0 : i32
    return %c0_i32, %c0_i32_0 : i32, i32
  }
  func.func @transform_2(%arg0: i32, %arg1: i32) -> (i32, i32) {
    %c0_i32 = arith.constant 0 : i32
    %c0_i32_0 = arith.constant 0 : i32
    %c0_i32_1 = arith.constant 0 : i32
    return %c0_i32, %c0_i32_0 : i32, i32
  }
  func.func @transform_3(%arg0: i32, %arg1: i32) -> (i32, i32) {
    %c0_i32 = arith.constant 0 : i32
    %c0_i32_0 = arith.constant 0 : i32
    %c0_i32_1 = arith.constant 0 : i32
    return %c0_i32, %c0_i32_0 : i32, i32
  }
  func.func @transform_4(%arg0: i32, %arg1: i32) -> (i32, i32, i32) {
    %c0_i32 = arith.constant 0 : i32
    %c0_i32_0 = arith.constant 0 : i32
    %c0_i32_1 = arith.constant 0 : i32
    %c0_i32_2 = arith.constant 0 : i32
    return %c0_i32, %c0_i32_0, %c0_i32_1 : i32, i32, i32
  }
  func.func @transform_5(%arg0: i32, %arg1: i32) -> (i32, i32) {
    %c0_i32 = arith.constant 0 : i32
    %c0_i32_0 = arith.constant 0 : i32
    %c0_i32_1 = arith.constant 0 : i32
    return %c0_i32, %c0_i32_0 : i32, i32
  }
  func.func @transform_6(%arg0: i32, %arg1: i32) -> (i32, i32) {
    %c0_i32 = arith.constant 0 : i32
    %c0_i32_0 = arith.constant 0 : i32
    %c0_i32_1 = arith.constant 0 : i32
    return %c0_i32, %c0_i32_0 : i32, i32
  }
  func.func @transform_7(%arg0: i32, %arg1: i32) -> (i32, i32) {
    %c0_i32 = arith.constant 0 : i32
    %c0_i32_0 = arith.constant 0 : i32
    %c0_i32_1 = arith.constant 0 : i32
    return %c0_i32, %c0_i32_0 : i32, i32
  }
  func.func @transform_8(%arg0: i32, %arg1: i32) -> (i32, i32) {
    %c0_i32 = arith.constant 0 : i32
    %c0_i32_0 = arith.constant 0 : i32
    %c0_i32_1 = arith.constant 0 : i32
    return %c0_i32, %c0_i32_0 : i32, i32
  }
  func.func @transform_9(%arg0: i32, %arg1: i32) -> (i32, i32, i32, i32) {
    %c0_i32 = arith.constant 0 : i32
    %c0_i32_0 = arith.constant 0 : i32
    %c0_i32_1 = arith.constant 0 : i32
    return %arg0, %arg1, %c0_i32, %c0_i32_0 : i32, i32, i32, i32
  }
}

</mosaic_0001>

<llo_original>
// kernel: bottleneck_forward.1
$region0: #{bottleneck_forward.1}
  #allocation0 [shape = 'u32[]', space=smem, size = 0x4, offset = 0x4, fixed_abs, tag = 'smem constant byte address 0x4 - core index']
  #allocation1 [shape = 'u32[144,128]{1,0:T(1,128)}', space=vmem, size = 0x12000, scoped, tag = 'internal scratch']
  %s0 = inlined_call_operand.vmem [shape: f32[2,18,16,4], index: 0, kind: input, shape index: {}]
  %s1 = inlined_call_operand.vmem [shape: f32[4,8], index: 1, kind: input, shape index: {}]
  %s2 = inlined_call_operand.vmem [shape: f32[1,8], index: 2, kind: input, shape index: {}]
  %s3 = inlined_call_operand.vmem [shape: f32[1,8], index: 3, kind: input, shape index: {}]
  %s4 = inlined_call_operand.vmem [shape: f32[3,3,8], index: 4, kind: input, shape index: {}]
  %s5 = inlined_call_operand.vmem [shape: f32[1,8], index: 5, kind: input, shape index: {}]
  %s6 = inlined_call_operand.vmem [shape: f32[1,8], index: 6, kind: input, shape index: {}]
  %s7 = inlined_call_operand.vmem [shape: f32[8,4], index: 7, kind: input, shape index: {}]
  %s8 = inlined_call_operand.vmem [shape: f32[1,4], index: 8, kind: input, shape index: {}]
  %s9 = inlined_call_operand.vmem [shape: f32[2,16,16,4], index: 9, kind: output, shape index: {}]
  %s10 = sld [smem:[#allocation0]]
  $region69: #{bottleneck_forward.1} parent=0
    _
  %s12 = ssub.s32 1, %s10
  %s13 = scalar_select 0, %s12, %s10
  loop: start=0, step=1, limit=6
  $region2: #{bottleneck_forward.1} parent=0 // loop_pre_header
    _
  $region3: #{bottleneck_forward.1} parent=0 // loop_header
    %s15 = sphi 0, %s19
    %p16 = scmp.ge.s32.totalorder %s15, 6
    %s22 = sphi 0, %s34
    %s23 = sphi 0, %s30
    %s24 = sphi 0, %s22
    %s25 = sphi 0, %s23
    %s26 = sphi 0, %s24
    %s27 = sphi 0, %s25
    %s37 = sphi 0, %s39
    %s40 = sphi 0, %s37
    %s41 = sphi 0, %s40
    %s57 = sphi 0, %s41
    %s61 = sphi 0, %s61
    %s63 = sphi 0, %s61
    %s64 = sphi 0, %s63
    %s78 = sphi 0, %s64
    %s82 = sphi 0, %s82
    %s84 = sphi 0, %s82
    %s85 = sphi 0, %s84
    %s99 = sphi 0, %s85
    %s103 = sphi 0, %s103
    %s105 = sphi 0, %s103
    %s106 = sphi 0, %s105
    %s120 = sphi 0, %s106
    %s124 = sphi 0, %s124
    %s126 = sphi 0, %s124
    %s127 = sphi 0, %s126
    %s141 = sphi 0, %s127
    %s145 = sphi 0, %s145
    %s147 = sphi 0, %s145
    %s148 = sphi 0, %s147
    %s162 = sphi 0, %s148
    %s166 = sphi 0, %s166
    %s168 = sphi 0, %s166
    %s169 = sphi 0, %s168
    %s183 = sphi 0, %s169
    %s187 = sphi 0, %s187
    %s189 = sphi 0, %s187
    %s190 = sphi 0, %s189
    %s204 = sphi 0, %s190
    %s208 = sphi 0, %s208
    %s210 = sphi 0, %s208
    %s211 = sphi 0, %s210
    %s225 = sphi 0, %s211
    %s233 = sphi 0, %s235
    %s236 = sphi 0, %s233
    %s237 = sphi 0, %s236
    %s253 = sphi 0, %s237
  $region4: #{bottleneck_forward.1} parent=0 // loop_header_branch
    %18 = sbr.rel (%p16) target = $region8
  $region5: #{bottleneck_forward.1} parent=0 // loop_body
    %s20 = ssub.s32 %s15, 1
    %s21 = ssub.s32 %s15, 2
    %s28 = sadd.s32 1, %s23
    %p29 = scmp.ge.s32.totalorder %s28, 2
    %s30 = scalar_select %p29, 0, %s28
    %s31 = sadd.s32 1, %s22
    %s32 = scalar_select %p29, %s31, %s22
    %p33 = scmp.ge.s32.totalorder %s32, 2
    %s34 = scalar_select %p33, 0, %s32
    %s35 = ssub.s32 %s22, %s34
    %p36 = scmp.eq.s32.totalorder %s35, 0
    %s38 = sadd.s32 %s37, 1
    %s39 = scalar_select %p36, %s37, %s38
    %p42 = pneg %p36
    %p43 = scmp.eq.s32.totalorder %s15, 3
    %p44 = por %p42, %p43
    %p45 = scmp.ne.s32.totalorder %s37, %s40
    %p46 = scmp.eq.s32.totalorder %s15, 0
    %p47 = por %p45, %p46
    %p48 = scmp.ne.s32.totalorder %s37, %s40
    %p49 = scmp.eq.s32.totalorder %s20, 3
    %p50 = por %p48, %p49
    %p51 = scmp.ne.s32.totalorder %s40, %s41
    %p52 = scmp.eq.s32.totalorder %s20, 0
    %p53 = por %p51, %p52
    %p54 = scmp.ne.s32.totalorder %s40, %s41
    %p55 = scmp.eq.s32.totalorder %s21, 3
    %p56 = por %p54, %p55
    %p58 = scmp.ne.s32.totalorder %s41, %s57
    %p59 = scmp.eq.s32.totalorder %s21, 0
    %p60 = por %p58, %p59
    %s62 = sadd.s32 %s61, 1
    %p65 = scmp.eq.s32.totalorder %s15, 3
    %p66 = scmp.ne.s32.totalorder %s61, %s63
    %p67 = scmp.eq.s32.totalorder %s15, 0
    %p68 = por %p66, %p67
    %p69 = scmp.ne.s32.totalorder %s61, %s63
    %p70 = scmp.eq.s32.totalorder %s20, 3
    %p71 = por %p69, %p70
    %p72 = scmp.ne.s32.totalorder %s63, %s64
    %p73 = scmp.eq.s32.totalorder %s20, 0
    %p74 = por %p72, %p73
    %p75 = scmp.ne.s32.totalorder %s63, %s64
    %p76 = scmp.eq.s32.totalorder %s21, 3
    %p77 = por %p75, %p76
    %p79 = scmp.ne.s32.totalorder %s64, %s78
    %p80 = scmp.eq.s32.totalorder %s21, 0
    %p81 = por %p79, %p80
    %s83 = sadd.s32 %s82, 1
    %p86 = scmp.eq.s32.totalorder %s15, 3
    %p87 = scmp.ne.s32.totalorder %s82, %s84
    %p88 = scmp.eq.s32.totalorder %s15, 0
    %p89 = por %p87, %p88
    %p90 = scmp.ne.s32.totalorder %s82, %s84
    %p91 = scmp.eq.s32.totalorder %s20, 3
    %p92 = por %p90, %p91
    %p93 = scmp.ne.s32.totalorder %s84, %s85
    %p94 = scmp.eq.s32.totalorder %s20, 0
    %p95 = por %p93, %p94
    %p96 = scmp.ne.s32.totalorder %s84, %s85
    %p97 = scmp.eq.s32.totalorder %s21, 3
    %p98 = por %p96, %p97
    %p100 = scmp.ne.s32.totalorder %s85, %s99
    %p101 = scmp.eq.s32.totalorder %s21, 0
    %p102 = por %p100, %p101
    %s104 = sadd.s32 %s103, 1
    %p107 = scmp.eq.s32.totalorder %s15, 3
    %p108 = scmp.ne.s32.totalorder %s103, %s105
    %p109 = scmp.eq.s32.totalorder %s15, 0
    %p110 = por %p108, %p109
    %p111 = scmp.ne.s32.totalorder %s103, %s105
    %p112 = scmp.eq.s32.totalorder %s20, 3
    %p113 = por %p111, %p112
    %p114 = scmp.ne.s32.totalorder %s105, %s106
    %p115 = scmp.eq.s32.totalorder %s20, 0
    %p116 = por %p114, %p115
    %p117 = scmp.ne.s32.totalorder %s105, %s106
    %p118 = scmp.eq.s32.totalorder %s21, 3
    %p119 = por %p117, %p118
    %p121 = scmp.ne.s32.totalorder %s106, %s120
    %p122 = scmp.eq.s32.totalorder %s21, 0
    %p123 = por %p121, %p122
    %s125 = sadd.s32 %s124, 1
    %p128 = scmp.eq.s32.totalorder %s15, 3
    %p129 = scmp.ne.s32.totalorder %s124, %s126
    %p130 = scmp.eq.s32.totalorder %s15, 0
    %p131 = por %p129, %p130
    %p132 = scmp.ne.s32.totalorder %s124, %s126
    %p133 = scmp.eq.s32.totalorder %s20, 3
    %p134 = por %p132, %p133
    %p135 = scmp.ne.s32.totalorder %s126, %s127
    %p136 = scmp.eq.s32.totalorder %s20, 0
    %p137 = por %p135, %p136
    %p138 = scmp.ne.s32.totalorder %s126, %s127
    %p139 = scmp.eq.s32.totalorder %s21, 3
    %p140 = por %p138, %p139
    %p142 = scmp.ne.s32.totalorder %s127, %s141
    %p143 = scmp.eq.s32.totalorder %s21, 0
    %p144 = por %p142, %p143
    %s146 = sadd.s32 %s145, 1
    %p149 = scmp.eq.s32.totalorder %s15, 3
    %p150 = scmp.ne.s32.totalorder %s145, %s147
    %p151 = scmp.eq.s32.totalorder %s15, 0
    %p152 = por %p150, %p151
    %p153 = scmp.ne.s32.totalorder %s145, %s147
    %p154 = scmp.eq.s32.totalorder %s20, 3
    %p155 = por %p153, %p154
    %p156 = scmp.ne.s32.totalorder %s147, %s148
    %p157 = scmp.eq.s32.totalorder %s20, 0
    %p158 = por %p156, %p157
    %p159 = scmp.ne.s32.totalorder %s147, %s148
    %p160 = scmp.eq.s32.totalorder %s21, 3
    %p161 = por %p159, %p160
    %p163 = scmp.ne.s32.totalorder %s148, %s162
    %p164 = scmp.eq.s32.totalorder %s21, 0
    %p165 = por %p163, %p164
    %s167 = sadd.s32 %s166, 1
    %p170 = scmp.eq.s32.totalorder %s15, 3
    %p171 = scmp.ne.s32.totalorder %s166, %s168
    %p172 = scmp.eq.s32.totalorder %s15, 0
    %p173 = por %p171, %p172
    %p174 = scmp.ne.s32.totalorder %s166, %s168
    %p175 = scmp.eq.s32.totalorder %s20, 3
    %p176 = por %p174, %p175
    %p177 = scmp.ne.s32.totalorder %s168, %s169
    %p178 = scmp.eq.s32.totalorder %s20, 0
    %p179 = por %p177, %p178
    %p180 = scmp.ne.s32.totalorder %s168, %s169
    %p181 = scmp.eq.s32.totalorder %s21, 3
    %p182 = por %p180, %p181
    %p184 = scmp.ne.s32.totalorder %s169, %s183
    %p185 = scmp.eq.s32.totalorder %s21, 0
    %p186 = por %p184, %p185
    %s188 = sadd.s32 %s187, 1
    %p191 = scmp.eq.s32.totalorder %s15, 3
    %p192 = scmp.ne.s32.totalorder %s187, %s189
    %p193 = scmp.eq.s32.totalorder %s15, 0
    %p194 = por %p192, %p193
    %p195 = scmp.ne.s32.totalorder %s187, %s189
    %p196 = scmp.eq.s32.totalorder %s20, 3
    %p197 = por %p195, %p196
    %p198 = scmp.ne.s32.totalorder %s189, %s190
    %p199 = scmp.eq.s32.totalorder %s20, 0
    %p200 = por %p198, %p199
    %p201 = scmp.ne.s32.totalorder %s189, %s190
    %p202 = scmp.eq.s32.totalorder %s21, 3
    %p203 = por %p201, %p202
    %p205 = scmp.ne.s32.totalorder %s190, %s204
    %p206 = scmp.eq.s32.totalorder %s21, 0
    %p207 = por %p205, %p206
    %s209 = sadd.s32 %s208, 1
    %p212 = scmp.eq.s32.totalorder %s15, 3
    %p213 = scmp.ne.s32.totalorder %s208, %s210
    %p214 = scmp.eq.s32.totalorder %s15, 0
    %p215 = por %p213, %p214
    %p216 = scmp.ne.s32.totalorder %s208, %s210
    %p217 = scmp.eq.s32.totalorder %s20, 3
    %p218 = por %p216, %p217
    %p219 = scmp.ne.s32.totalorder %s210, %s211
    %p220 = scmp.eq.s32.totalorder %s20, 0
    %p221 = por %p219, %p220
    %p222 = scmp.ne.s32.totalorder %s210, %s211
    %p223 = scmp.eq.s32.totalorder %s21, 3
    %p224 = por %p222, %p223
    %p226 = scmp.ne.s32.totalorder %s211, %s225
    %p227 = scmp.eq.s32.totalorder %s21, 0
    %p228 = por %p226, %p227
    %s229 = ssub.s32 %s22, %s34
    %s230 = ssub.s32 %s23, %s30
    %s231 = sor.u32 %s229, %s230
    %p232 = scmp.eq.s32.totalorder %s231, 0
    %s234 = sadd.s32 %s233, 1
    %s235 = scalar_select %p232, %s233, %s234
    %p238 = pneg %p232
    %p239 = scmp.eq.s32.totalorder %s15, 3
    %p240 = por %p238, %p239
    %p241 = scmp.ne.s32.totalorder %s233, %s236
    %p242 = scmp.eq.s32.totalorder %s15, 0
    %p243 = por %p241, %p242
    %p244 = scmp.ne.s32.totalorder %s233, %s236
    %p245 = scmp.eq.s32.totalorder %s20, 3
    %p246 = por %p244, %p245
    %p247 = scmp.ne.s32.totalorder %s236, %s237
    %p248 = scmp.eq.s32.totalorder %s20, 0
    %p249 = por %p247, %p248
    %p250 = scmp.ne.s32.totalorder %s236, %s237
    %p251 = scmp.eq.s32.totalorder %s21, 3
    %p252 = por %p250, %p251
    %p254 = scmp.ne.s32.totalorder %s237, %s253
    %p255 = scmp.eq.s32.totalorder %s21, 0
    %p256 = por %p254, %p255
    %p257 = scmp.le.s32.totalorder 1, %s15
    %p258 = scmp.lt.s32.totalorder %s15, 5
    %p259 = pnand %p257, %p258
    %p260 = pneg %p259
    // Predicated region
    $region9: #{bottleneck_forward.1} parent=5 // pred_check
      _
    $region10: #{bottleneck_forward.1} parent=5 // pred_check_branch
      %262 = sbr.rel (%p259) target = $region12
    $region11: #{bottleneck_forward.1} parent=5 // pred_region
      %s263 = ssub.s32 %s15, 1
      // Predicated region
      $region13: #{bottleneck_forward.1} parent=11 // pred_check
        %p264 = pneg %p74
      $region14: #{bottleneck_forward.1} parent=11 // pred_check_branch
        %266 = sbr.rel (%p264) target = $region16
      $region15: #{bottleneck_forward.1} parent=11 // pred_region
        _
      $region16: #{bottleneck_forward.1} parent=11 // pred_fallthru
        _
      // Predicated region
      $region17: #{bottleneck_forward.1} parent=11 // pred_check
        %p267 = pneg %p95
      $region18: #{bottleneck_forward.1} parent=11 // pred_check_branch
        %269 = sbr.rel (%p267) target = $region20
      $region19: #{bottleneck_forward.1} parent=11 // pred_region
        _
      $region20: #{bottleneck_forward.1} parent=11 // pred_fallthru
        _
      // Predicated region
      $region21: #{bottleneck_forward.1} parent=11 // pred_check
        %p270 = pneg %p116
      $region22: #{bottleneck_forward.1} parent=11 // pred_check_branch
        %272 = sbr.rel (%p270) target = $region24
      $region23: #{bottleneck_forward.1} parent=11 // pred_region
        _
      $region24: #{bottleneck_forward.1} parent=11 // pred_fallthru
        _
      // Predicated region
      $region25: #{bottleneck_forward.1} parent=11 // pred_check
        %p273 = pneg %p137
      $region26: #{bottleneck_forward.1} parent=11 // pred_check_branch
        %275 = sbr.rel (%p273) target = $region28
      $region27: #{bottleneck_forward.1} parent=11 // pred_region
        _
      $region28: #{bottleneck_forward.1} parent=11 // pred_fallthru
        _
      // Predicated region
      $region29: #{bottleneck_forward.1} parent=11 // pred_check
        %p276 = pneg %p158
      $region30: #{bottleneck_forward.1} parent=11 // pred_check_branch
        %278 = sbr.rel (%p276) target = $region32
      $region31: #{bottleneck_forward.1} parent=11 // pred_region
        _
      $region32: #{bottleneck_forward.1} parent=11 // pred_fallthru
        _
      // Predicated region
      $region33: #{bottleneck_forward.1} parent=11 // pred_check
        %p279 = pneg %p179
      $region34: #{bottleneck_forward.1} parent=11 // pred_check_branch
        %281 = sbr.rel (%p279) target = $region36
      $region35: #{bottleneck_forward.1} parent=11 // pred_region
        _
      $region36: #{bottleneck_forward.1} parent=11 // pred_fallthru
        _
      // Predicated region
      $region37: #{bottleneck_forward.1} parent=11 // pred_check
        %p282 = pneg %p200
      $region38: #{bottleneck_forward.1} parent=11 // pred_check_branch
        %284 = sbr.rel (%p282) target = $region40
      $region39: #{bottleneck_forward.1} parent=11 // pred_region
        _
      $region40: #{bottleneck_forward.1} parent=11 // pred_fallthru
        _
      // Predicated region
      $region41: #{bottleneck_forward.1} parent=11 // pred_check
        %p285 = pneg %p221
      $region42: #{bottleneck_forward.1} parent=11 // pred_check_branch
        %287 = sbr.rel (%p285) target = $region44
      $region43: #{bottleneck_forward.1} parent=11 // pred_region
        _
      $region44: #{bottleneck_forward.1} parent=11 // pred_fallthru
        _
    $region12: #{bottleneck_forward.1} parent=5 // pred_fallthru
      _
    %p288 = scmp.lt.s32.totalorder %s15, 4
    // Predicated region
    $region45: #{bottleneck_forward.1} parent=5 // pred_check
      %p289 = pneg %p288
    $region46: #{bottleneck_forward.1} parent=5 // pred_check_branch
      %291 = sbr.rel (%p289) target = $region48
    $region47: #{bottleneck_forward.1} parent=5 // pred_region
      // Predicated region
      $region49: #{bottleneck_forward.1} parent=47 // pred_check
        %p292 = pneg %p47
      $region50: #{bottleneck_forward.1} parent=47 // pred_check_branch
        %294 = sbr.rel (%p292) target = $region52
      $region51: #{bottleneck_forward.1} parent=47 // pred_region
        %p295 = scmp.lt.s32.totalorder %s22, 1
        %s296 = scalar_select %p295, %s22, 1
        %s297 = smul.addr %s296, 36
        %s298 = smul.addr %s297, 8
        %s299 = scalar_lea.vmem %s0, %s298
      $region52: #{bottleneck_forward.1} parent=47 // pred_fallthru
        _
    $region48: #{bottleneck_forward.1} parent=5 // pred_fallthru
      _
    %p300 = scmp.le.s32.totalorder 1, %s15
    %p301 = scmp.lt.s32.totalorder %s15, 5
    %p302 = pnand %p300, %p301
    %p303 = pneg %p302
    // Predicated region
    $region53: #{bottleneck_forward.1} parent=5 // pred_check
      _
    $region54: #{bottleneck_forward.1} parent=5 // pred_check_branch
      %305 = sbr.rel (%p302) target = $region56
    $region55: #{bottleneck_forward.1} parent=5 // pred_region
      %s306 = ssub.s32 %s15, 1
      %p307 = scmp.lt.s32.totalorder %s24, 1
      %s308 = scalar_select %p307, %s24, 1
      %s309 = smul.addr %s308, 36
      %s310 = smul.addr %s309, 8
      %s311 = scalar_lea.vmem %s0, %s310
      %p312 = pneg %p53
      %p313 = pneg %p50
      %p314 = pneg %p74
      %p315 = pneg %p71
      %p316 = pneg %p95
      %p317 = pneg %p92
      %p318 = pneg %p116
      %p319 = pneg %p113
      %p320 = pneg %p137
      %p321 = pneg %p134
      %p322 = pneg %p158
      %p323 = pneg %p155
      %p324 = pneg %p179
      %p325 = pneg %p176
      %p326 = pneg %p200
      %p327 = pneg %p197
      %p328 = pneg %p221
      %p329 = pneg %p218
      %p330 = pneg %p249
      %p331 = pneg %p246
      %s332 = smul.u32 8, %s25
      %p333 = scmp.lt.s32.totalorder %s24, 1
      %s334 = scalar_select %p333, %s24, 1
      %p335 = scmp.lt.s32.totalorder %s332, 15
      %s336 = scalar_select %p335, %s332, 15
      %s337 = smul.addr %s336, 2
      %s338 = smul.addr %s334, 32
      %s339 = sadd.s32 %s337, %s338
      %s340 = smul.addr %s339, 8
      %s341 = scalar_lea.vmem %s9, %s340
      %p342 = scmp.lt.s32.totalorder %s24, 1
      %s343 = scalar_select %p342, %s24, 1
      %s344 = smul.addr %s343, 36
      %s345 = smul.addr %s344, 8
      %s346 = scalar_lea.vmem %s0, %s345
      %s347 = smul.u32 8, %s25
      %p348 = scmp.lt.s32.totalorder %s24, 1
      %s349 = scalar_select %p348, %s24, 1
      %p350 = scmp.lt.s32.totalorder %s347, 15
      %s351 = scalar_select %p350, %s347, 15
      %s352 = smul.addr %s351, 2
      %s353 = smul.addr %s349, 32
      %s354 = sadd.s32 %s352, %s353
      %s355 = smul.addr %s354, 8
      %s356 = scalar_lea.vmem %s9, %s355
      %s357 = smul.u32 8, %s25
      %s358 = smul.u32 %s25, 8
      %s359 = smul.u32 %s358, 16
      %s360 = scalar_lea.vmem %s346, %s359
      %v361 = vld [vmem:[%s360] sm:$0xff]
      %v362 = vld [vmem:[%s360 + $0x8] sm:$0xff]
      %v363 = vld [vmem:[%s360 + $0x10] sm:$0xff]
      %v364 = vld [vmem:[%s360 + $0x18] sm:$0xff]
      %v365 = vld [vmem:[%s360 + $0x20] sm:$0xff]
      %v366 = vld [vmem:[%s360 + $0x28] sm:$0xff]
      %v367 = vld [vmem:[%s360 + $0x30] sm:$0xff]
      %v368 = vld [vmem:[%s360 + $0x38] sm:$0xff]
      %v369 = vld [vmem:[%s360 + $0x40] sm:$0xff]
      %v370 = vld [vmem:[%s360 + $0x48] sm:$0xff]
      %v371 = vld [vmem:[%s360 + $0x50] sm:$0xff]
      %v372 = vld [vmem:[%s360 + $0x58] sm:$0xff]
      %v373 = vld [vmem:[%s360 + $0x60] sm:$0xff]
      %v374 = vld [vmem:[%s360 + $0x68] sm:$0xff]
      %v375 = vld [vmem:[%s360 + $0x70] sm:$0xff]
      %v376 = vld [vmem:[%s360 + $0x78] sm:$0xff]
      %v377 = vld [vmem:[%s360 + $0x80] sm:$0xff]
      %v378 = vld [vmem:[%s360 + $0x88] sm:$0xff]
      %v379 = vld [vmem:[%s360 + $0x90] sm:$0xff]
      %v380 = vld [vmem:[%s360 + $0x98] sm:$0xff]
      %v381 = vld [vmem:[%s1] sm:$0xf]
      %v382 = vld [vmem:[%s2] sm:$0x1]
      %v384 = vlaneseq
      %v385 = vshrl.u32 %v384, 7
      %v386 = vsub.s32 0, %v385
      %v387 = vrot.slane %v382, %v386
      %vm389 = vcmask 31744
      %v391 = vsel %vm389, %v361, 0
      %v394 = vsel %vm389, %v362, 0
      %v397 = vsel %vm389, %v363, 0
      %v400 = vsel %vm389, %v364, 0
      %v403 = vsel %vm389, %v365, 0
      %v406 = vsel %vm389, %v366, 0
      %v409 = vsel %vm389, %v367, 0
      %v412 = vsel %vm389, %v368, 0
      %v415 = vsel %vm389, %v369, 0
      %v418 = vsel %vm389, %v370, 0
      %v421 = vsel %vm389, %v371, 0
      %v424 = vsel %vm389, %v372, 0
      %v427 = vsel %vm389, %v373, 0
      %v430 = vsel %vm389, %v374, 0
      %v433 = vsel %vm389, %v375, 0
      %v436 = vsel %vm389, %v376, 0
      %v439 = vsel %vm389, %v377, 0
      %v442 = vsel %vm389, %v378, 0
      %v445 = vsel %vm389, %v379, 0
      %v448 = vsel %vm389, %v380, 0
      %vm450 = vcmask 1043456
      %v452 = vsel %vm450, %v381, 0
      %454 = vmatprep.subr.mxu0 0.0
      %455 = vmatpush1.msra.mxu0 %v452
      %456 = vmatprep.subr.mxu0 0.0
      %457 = vmatpush1.msra.mxu0 0.0
      %458 = vmatprep.subr.mxu0 0.0
      %459 = vmatpush1.msra.mxu0 0.0
      %460 = vmatprep.subr.mxu0 0.0
      %461 = vmatpush1.msra.mxu0 0.0
      %462 = vmatprep.subr.mxu0 0.0
      %463 = vmatpush1.msra.mxu0 0.0
      %464 = vmatprep.subr.mxu0 0.0
      %465 = vmatpush1.msra.mxu0 0.0
      %466 = vmatprep.subr.mxu0 0.0
      %467 = vmatpush1.msra.mxu0 0.0
      %468 = vmatprep.subr.mxu0 0.0
      %469 = vmatpush1.msra.mxu0 0.0
      %470 = vmatprep.subr.mxu0 0.0
      %471 = vmatpush1.msra.mxu0 0.0
      %472 = vmatprep.subr.mxu0 0.0
      %473 = vmatpush1.msra.mxu0 0.0
      %474 = vmatprep.subr.mxu0 0.0
      %475 = vmatpush1.msra.mxu0 0.0
      %476 = vmatprep.subr.mxu0 0.0
      %477 = vmatpush1.msra.mxu0 0.0
      %478 = vmatprep.subr.mxu0 0.0
      %479 = vmatpush1.msra.mxu0 0.0
      %480 = vmatprep.subr.mxu0 0.0
      %481 = vmatpush1.msra.mxu0 0.0
      %482 = vmatprep.subr.mxu0 0.0
      %483 = vmatpush1.msra.mxu0 0.0
      %484 = vmatprep.subr.mxu0 0.0
      %485 = vmatpush1.msra.mxu0 0.0
      %486 = vmatprep.subr.mxu0 0.0
      %487 = vmatpush1.msra.mxu0 0.0
      %488 = vmatprep.subr.mxu0 0.0
      %489 = vmatpush1.msra.mxu0 0.0
      %490 = vmatprep.subr.mxu0 0.0
      %491 = vmatpush1.msra.mxu0 0.0
      %492 = vmatprep.subr.mxu0 0.0
      %493 = vmatpush1.msra.mxu0 0.0
      %494 = vmatprep.subr.mxu0 0.0
      %495 = vmatpush1.msra.mxu0 0.0
      %496 = vmatprep.subr.mxu0 0.0
      %497 = vmatpush1.msra.mxu0 0.0
      %498 = vmatprep.subr.mxu0 0.0
      %499 = vmatpush1.msra.mxu0 0.0
      %500 = vmatprep.subr.mxu0 0.0
      %501 = vmatpush1.msra.mxu0 0.0
      %502 = vmatprep.subr.mxu0 0.0
      %503 = vmatpush1.msra.mxu0 0.0
      %504 = vmatprep.subr.mxu0 0.0
      %505 = vmatpush1.msra.mxu0 0.0
      %506 = vmatprep.subr.mxu0 0.0
      %507 = vmatpush1.msra.mxu0 0.0
      %508 = vmatprep.subr.mxu0 0.0
      %509 = vmatpush1.msra.mxu0 0.0
      %510 = vmatprep.subr.mxu0 0.0
      %511 = vmatpush1.msra.mxu0 0.0
      %512 = vmatprep.subr.mxu0 0.0
      %513 = vmatpush1.msra.mxu0 0.0
      %514 = vmatprep.subr.mxu0 0.0
      %515 = vmatpush1.msra.mxu0 0.0
      %516 = vmatprep.subr.mxu0 0.0
      %517 = vmatpush1.msra.mxu0 0.0
      %518 = vmatprep.mubr.f32.mxu0 0.0
      %519 = vmatmul.mubr.f32.gmra.mrb[0].mxu0 %v391
      %v520 = vpop.f32.mrb[0].mxu0
      %v521 = vadd.f32 %v387, %v520
      %v522 = vpop.f32.mrb[0].mxu0
      %523 = vmatprep.mubr.f32.mxu0 0.0
      %524 = vmatmul.mubr.f32.gmra.mrb[0].mxu0 %v394
      %v525 = vpop.f32.mrb[0].mxu0
      %v526 = vadd.f32 %v387, %v525
      %v527 = vpop.f32.mrb[0].mxu0
      %528 = vmatprep.mubr.f32.mxu0 0.0
      %529 = vmatmul.mubr.f32.gmra.mrb[0].mxu0 %v397
      %v530 = vpop.f32.mrb[0].mxu0
      %v531 = vadd.f32 %v387, %v530
      %v532 = vpop.f32.mrb[0].mxu0
      %533 = vmatprep.mubr.f32.mxu0 0.0
      %534 = vmatmul.mubr.f32.gmra.mrb[0].mxu0 %v400
      %v535 = vpop.f32.mrb[0].mxu0
      %v536 = vadd.f32 %v387, %v535
      %v537 = vpop.f32.mrb[0].mxu0
      %538 = vmatprep.mubr.f32.mxu0 0.0
      %539 = vmatmul.mubr.f32.gmra.mrb[0].mxu0 %v403
      %v540 = vpop.f32.mrb[0].mxu0
      %v541 = vadd.f32 %v387, %v540
      %v542 = vpop.f32.mrb[0].mxu0
      %543 = vmatprep.mubr.f32.mxu0 0.0
      %544 = vmatmul.mubr.f32.gmra.mrb[0].mxu0 %v406
      %v545 = vpop.f32.mrb[0].mxu0
      %v546 = vadd.f32 %v387, %v545
      %v547 = vpop.f32.mrb[0].mxu0
      %548 = vmatprep.mubr.f32.mxu0 0.0
      %549 = vmatmul.mubr.f32.gmra.mrb[0].mxu0 %v409
      %v550 = vpop.f32.mrb[0].mxu0
      %v551 = vadd.f32 %v387, %v550
      %v552 = vpop.f32.mrb[0].mxu0
      %553 = vmatprep.mubr.f32.mxu0 0.0
      %554 = vmatmul.mubr.f32.gmra.mrb[0].mxu0 %v412
      %v555 = vpop.f32.mrb[0].mxu0
      %v556 = vadd.f32 %v387, %v555
      %v557 = vpop.f32.mrb[0].mxu0
      %558 = vmatprep.mubr.f32.mxu0 0.0
      %559 = vmatmul.mubr.f32.gmra.mrb[0].mxu0 %v415
      %v560 = vpop.f32.mrb[0].mxu0
      %v561 = vadd.f32 %v387, %v560
      %v562 = vpop.f32.mrb[0].mxu0
      %563 = vmatprep.mubr.f32.mxu0 0.0
      %564 = vmatmul.mubr.f32.gmra.mrb[0].mxu0 %v418
      %v565 = vpop.f32.mrb[0].mxu0
      %v566 = vadd.f32 %v387, %v565
      %v567 = vpop.f32.mrb[0].mxu0
      %568 = vmatprep.mubr.f32.mxu0 0.0
      %569 = vmatmul.mubr.f32.gmra.mrb[0].mxu0 %v421
      %v570 = vpop.f32.mrb[0].mxu0
      %v571 = vadd.f32 %v387, %v570
      %v572 = vpop.f32.mrb[0].mxu0
      %573 = vmatprep.mubr.f32.mxu0 0.0
      %574 = vmatmul.mubr.f32.gmra.mrb[0].mxu0 %v424
      %v575 = vpop.f32.mrb[0].mxu0
      %v576 = vadd.f32 %v387, %v575
      %v577 = vpop.f32.mrb[0].mxu0
      %578 = vmatprep.mubr.f32.mxu0 0.0
      %579 = vmatmul.mubr.f32.gmra.mrb[0].mxu0 %v427
      %v580 = vpop.f32.mrb[0].mxu0
      %v581 = vadd.f32 %v387, %v580
      %v582 = vpop.f32.mrb[0].mxu0
      %583 = vmatprep.mubr.f32.mxu0 0.0
      %584 = vmatmul.mubr.f32.gmra.mrb[0].mxu0 %v430
      %v585 = vpop.f32.mrb[0].mxu0
      %v586 = vadd.f32 %v387, %v585
      %v587 = vpop.f32.mrb[0].mxu0
      %588 = vmatprep.mubr.f32.mxu0 0.0
      %589 = vmatmul.mubr.f32.gmra.mrb[0].mxu0 %v433
      %v590 = vpop.f32.mrb[0].mxu0
      %v591 = vadd.f32 %v387, %v590
      %v592 = vpop.f32.mrb[0].mxu0
      %593 = vmatprep.mubr.f32.mxu0 0.0
      %594 = vmatmul.mubr.f32.gmra.mrb[0].mxu0 %v436
      %v595 = vpop.f32.mrb[0].mxu0
      %v596 = vadd.f32 %v387, %v595
      %v597 = vpop.f32.mrb[0].mxu0
      %598 = vmatprep.mubr.f32.mxu0 0.0
      %599 = vmatmul.mubr.f32.gmra.mrb[0].mxu0 %v439
      %v600 = vpop.f32.mrb[0].mxu0
      %v601 = vadd.f32 %v387, %v600
      %v602 = vpop.f32.mrb[0].mxu0
      %603 = vmatprep.mubr.f32.mxu0 0.0
      %604 = vmatmul.mubr.f32.gmra.mrb[0].mxu0 %v442
      %v605 = vpop.f32.mrb[0].mxu0
      %v606 = vadd.f32 %v387, %v605
      %v607 = vpop.f32.mrb[0].mxu0
      %608 = vmatprep.mubr.f32.mxu0 0.0
      %609 = vmatmul.mubr.f32.gmra.mrb[0].mxu0 %v445
      %v610 = vpop.f32.mrb[0].mxu0
      %v611 = vadd.f32 %v387, %v610
      %v612 = vpop.f32.mrb[0].mxu0
      %613 = vmatprep.mubr.f32.mxu0 0.0
      %614 = vmatmul.mubr.f32.gmra.mrb[0].mxu0 %v448
      %v615 = vpop.f32.mrb[0].mxu0
      %v616 = vadd.f32 %v387, %v615
      %v617 = vpop.f32.mrb[0].mxu0
      %618 = vdwg.mxu0
      %vm619 = vcmp.ge.f32.partialorder %v521, 0.0
      %vm620 = vcmp.ge.f32.partialorder %v526, 0.0
      %vm621 = vcmp.ge.f32.partialorder %v531, 0.0
      %vm622 = vcmp.ge.f32.partialorder %v536, 0.0
      %vm623 = vcmp.ge.f32.partialorder %v541, 0.0
      %vm624 = vcmp.ge.f32.partialorder %v546, 0.0
      %vm625 = vcmp.ge.f32.partialorder %v551, 0.0
      %vm626 = vcmp.ge.f32.partialorder %v556, 0.0
      %vm627 = vcmp.ge.f32.partialorder %v561, 0.0
      %vm628 = vcmp.ge.f32.partialorder %v566, 0.0
      %vm629 = vcmp.ge.f32.partialorder %v571, 0.0
      %vm630 = vcmp.ge.f32.partialorder %v576, 0.0
      %vm631 = vcmp.ge.f32.partialorder %v581, 0.0
      %vm632 = vcmp.ge.f32.partialorder %v586, 0.0
      %vm633 = vcmp.ge.f32.partialorder %v591, 0.0
      %vm634 = vcmp.ge.f32.partialorder %v596, 0.0
      %vm635 = vcmp.ge.f32.partialorder %v601, 0.0
      %vm636 = vcmp.ge.f32.partialorder %v606, 0.0
      %vm637 = vcmp.ge.f32.partialorder %v611, 0.0
      %vm638 = vcmp.ge.f32.partialorder %v616, 0.0
      %v639 = vld [vmem:[%s3] sm:$0x1]
      %v641 = vlaneseq
      %v642 = vshrl.u32 %v641, 7
      %v643 = vsub.s32 0, %v642
      %v644 = vrot.slane %v639, %v643
      %v646 = vmul.f32 %v644, %v521
      %v647 = vmul.f32 %v644, %v526
      %v648 = vmul.f32 %v644, %v531
      %v649 = vmul.f32 %v644, %v536
      %v650 = vmul.f32 %v644, %v541
      %v651 = vmul.f32 %v644, %v546
      %v652 = vmul.f32 %v644, %v551
      %v653 = vmul.f32 %v644, %v556
      %v654 = vmul.f32 %v644, %v561
      %v655 = vmul.f32 %v644, %v566
      %v656 = vmul.f32 %v644, %v571
      %v657 = vmul.f32 %v644, %v576
      %v658 = vmul.f32 %v644, %v581
      %v659 = vmul.f32 %v644, %v586
      %v660 = vmul.f32 %v644, %v591
      %v661 = vmul.f32 %v644, %v596
      %v662 = vmul.f32 %v644, %v601
      %v663 = vmul.f32 %v644, %v606
      %v664 = vmul.f32 %v644, %v611
      %v665 = vmul.f32 %v644, %v616
      %v666 = vsel %vm619, %v521, %v646
      %v667 = vsel %vm620, %v526, %v647
      %v668 = vsel %vm621, %v531, %v648
      %v669 = vsel %vm622, %v536, %v649
      %v670 = vsel %vm623, %v541, %v650
      %v671 = vsel %vm624, %v546, %v651
      %v672 = vsel %vm625, %v551, %v652
      %v673 = vsel %vm626, %v556, %v653
      %v674 = vsel %vm627, %v561, %v654
      %v675 = vsel %vm628, %v566, %v655
      %v676 = vsel %vm629, %v571, %v656
      %v677 = vsel %vm630, %v576, %v657
      %v678 = vsel %vm631, %v581, %v658
      %v679 = vsel %vm632, %v586, %v659
      %v680 = vsel %vm633, %v591, %v660
      %v681 = vsel %vm634, %v596, %v661
      %v682 = vsel %vm635, %v601, %v662
      %v683 = vsel %vm636, %v606, %v663
      %v684 = vsel %vm637, %v611, %v664
      %v685 = vsel %vm638, %v616, %v665
      %v686 = vstv %s358
      %v687 = vadd.s32 %v686, 1
      %v688 = vadd.s32 %v686, 2
      %v689 = vadd.s32 %v686, 3
      %v690 = vadd.s32 %v686, 4
      %v691 = vadd.s32 %v686, 5
      %v692 = vadd.s32 %v686, 6
      %v693 = vadd.s32 %v686, 7
      %v694 = vadd.s32 %v686, 8
      %v695 = vadd.s32 %v686, 9
      %vm696 = vcmp.ge.s32.totalorder %v686, 1
      %vm697 = vcmp.ge.s32.totalorder %v687, 1
      %vm698 = vcmp.ge.s32.totalorder %v688, 1
      %vm699 = vcmp.ge.s32.totalorder %v689, 1
      %vm700 = vcmp.ge.s32.totalorder %v690, 1
      %vm701 = vcmp.ge.s32.totalorder %v691, 1
      %vm702 = vcmp.ge.s32.totalorder %v692, 1
      %vm703 = vcmp.ge.s32.totalorder %v693, 1
      %vm704 = vcmp.ge.s32.totalorder %v694, 1
      %vm705 = vcmp.ge.s32.totalorder %v695, 1
      %vm706 = vcmp.le.s32.totalorder %v686, 16
      %vm707 = vcmp.le.s32.totalorder %v687, 16
      %vm708 = vcmp.le.s32.totalorder %v688, 16
      %vm709 = vcmp.le.s32.totalorder %v689, 16
      %vm710 = vcmp.le.s32.totalorder %v690, 16
      %vm711 = vcmp.le.s32.totalorder %v691, 16
      %vm712 = vcmp.le.s32.totalorder %v692, 16
      %vm713 = vcmp.le.s32.totalorder %v693, 16
      %vm714 = vcmp.le.s32.totalorder %v694, 16
      %vm715 = vcmp.le.s32.totalorder %v695, 16
      %vm716 = vmand %vm696, %vm706
      %vm717 = vmand %vm697, %vm707
      %vm718 = vmand %vm698, %vm708
      %vm719 = vmand %vm699, %vm709
      %vm720 = vmand %vm700, %vm710
      %vm721 = vmand %vm701, %vm711
      %vm722 = vmand %vm702, %vm712
      %vm723 = vmand %vm703, %vm713
      %vm724 = vmand %vm704, %vm714
      %vm725 = vmand %vm705, %vm715
      %v726 = vsel %vm716, 1, 0
      %v727 = vsel %vm717, 1, 0
      %v728 = vsel %vm718, 1, 0
      %v729 = vsel %vm719, 1, 0
      %v730 = vsel %vm720, 1, 0
      %v731 = vsel %vm721, 1, 0
      %v732 = vsel %vm722, 1, 0
      %v733 = vsel %vm723, 1, 0
      %v734 = vsel %vm724, 1, 0
      %v735 = vsel %vm725, 1, 0
      %vm736 = vcmp.eq.s32.totalorder %v726, 1
      %vm737 = vcmp.eq.s32.totalorder %v727, 1
      %vm738 = vcmp.eq.s32.totalorder %v728, 1
      %vm739 = vcmp.eq.s32.totalorder %v729, 1
      %vm740 = vcmp.eq.s32.totalorder %v730, 1
      %vm741 = vcmp.eq.s32.totalorder %v731, 1
      %vm742 = vcmp.eq.s32.totalorder %v732, 1
      %vm743 = vcmp.eq.s32.totalorder %v733, 1
      %vm744 = vcmp.eq.s32.totalorder %v734, 1
      %vm745 = vcmp.eq.s32.totalorder %v735, 1
      %v746 = vsel %vm736, %v666, 0.0
      %v747 = vsel %vm736, %v667, 0.0
      %v748 = vsel %vm737, %v668, 0.0
      %v749 = vsel %vm737, %v669, 0.0
      %v750 = vsel %vm738, %v670, 0.0
      %v751 = vsel %vm738, %v671, 0.0
      %v752 = vsel %vm739, %v672, 0.0
      %v753 = vsel %vm739, %v673, 0.0
      %v754 = vsel %vm740, %v674, 0.0
      %v755 = vsel %vm740, %v675, 0.0
      %v756 = vsel %vm741, %v676, 0.0
      %v757 = vsel %vm741, %v677, 0.0
      %v758 = vsel %vm742, %v678, 0.0
      %v759 = vsel %vm742, %v679, 0.0
      %v760 = vsel %vm743, %v680, 0.0
      %v761 = vsel %vm743, %v681, 0.0
      %v762 = vsel %vm744, %v682, 0.0
      %v763 = vsel %vm744, %v683, 0.0
      %v764 = vsel %vm745, %v684, 0.0
      %v765 = vsel %vm745, %v685, 0.0
      %v766 = vld [vmem:[%s4] sm:$0x7]
      %v767 = vld [vmem:[%s4 + $0x4] sm:$0x7]
      %v768 = vld [vmem:[%s4 + $0x8] sm:$0x7]
      %v769 = vld [vmem:[%s5] sm:$0x1]
      %vm790 = vcmask 1040384
      %v791 = vrot.slane %v746, 7
      %v792 = vrot.slane %v747, 7
      %v793 = vsel %vm790, %v791, %v792
      %v794 = vrot.slane %v748, 7
      %v795 = vrot.slane %v749, 7
      %v796 = vsel %vm790, %v794, %v795
      %v797 = vrot.slane %v750, 7
      %v798 = vrot.slane %v751, 7
      %v799 = vsel %vm790, %v797, %v798
      %v800 = vrot.slane %v752, 7
      %v801 = vrot.slane %v753, 7
      %v802 = vsel %vm790, %v800, %v801
      %v803 = vrot.slane %v754, 7
      %v804 = vrot.slane %v755, 7
      %v805 = vsel %vm790, %v803, %v804
      %v806 = vrot.slane %v756, 7
      %v807 = vrot.slane %v757, 7
      %v808 = vsel %vm790, %v806, %v807
      %v809 = vrot.slane %v758, 7
      %v810 = vrot.slane %v759, 7
      %v811 = vsel %vm790, %v809, %v810
      %v812 = vrot.slane %v760, 7
      %v813 = vrot.slane %v761, 7
      %v814 = vsel %vm790, %v812, %v813
      %v815 = vrot.slane %v762, 7
      %v816 = vrot.slane %v763, 7
      %v817 = vsel %vm790, %v815, %v816
      %v818 = vrot.slane %v764, 7
      %v819 = vrot.slane %v765, 7
      %v820 = vsel %vm790, %v818, %v819
      %v841 = vsel %vm790, 0.0, %v791
      %v842 = vsel %vm790, 0.0, %v794
      %v843 = vsel %vm790, 0.0, %v797
      %v844 = vsel %vm790, 0.0, %v800
      %v845 = vsel %vm790, 0.0, %v803
      %v846 = vsel %vm790, 0.0, %v806
      %v847 = vsel %vm790, 0.0, %v809
      %v848 = vsel %vm790, 0.0, %v812
      %v849 = vsel %vm790, 0.0, %v815
      %v850 = vsel %vm790, 0.0, %v818
      %vm851 = vcmask 1046528
      %v852 = vrot.slane %v746, 1
      %v853 = vrot.slane %v747, 1
      %v854 = vsel %vm851, %v852, %v853
      %v855 = vrot.slane %v748, 1
      %v856 = vrot.slane %v749, 1
      %v857 = vsel %vm851, %v855, %v856
      %v858 = vrot.slane %v750, 1
      %v859 = vrot.slane %v751, 1
      %v860 = vsel %vm851, %v858, %v859
      %v861 = vrot.slane %v752, 1
      %v862 = vrot.slane %v753, 1
      %v863 = vsel %vm851, %v861, %v862
      %v864 = vrot.slane %v754, 1
      %v865 = vrot.slane %v755, 1
      %v866 = vsel %vm851, %v864, %v865
      %v867 = vrot.slane %v756, 1
      %v868 = vrot.slane %v757, 1
      %v869 = vsel %vm851, %v867, %v868
      %v870 = vrot.slane %v758, 1
      %v871 = vrot.slane %v759, 1
      %v872 = vsel %vm851, %v870, %v871
      %v873 = vrot.slane %v760, 1
      %v874 = vrot.slane %v761, 1
      %v875 = vsel %vm851, %v873, %v874
      %v876 = vrot.slane %v762, 1
      %v877 = vrot.slane %v763, 1
      %v878 = vsel %vm851, %v876, %v877
      %v879 = vrot.slane %v764, 1
      %v880 = vrot.slane %v765, 1
      %v881 = vsel %vm851, %v879, %v880
      %v902 = vsel %vm851, %v853, 0.0
      %v903 = vsel %vm851, %v856, 0.0
      %v904 = vsel %vm851, %v859, 0.0
      %v905 = vsel %vm851, %v862, 0.0
      %v906 = vsel %vm851, %v865, 0.0
      %v907 = vsel %vm851, %v868, 0.0
      %v908 = vsel %vm851, %v871, 0.0
      %v909 = vsel %vm851, %v874, 0.0
      %v910 = vsel %vm851, %v877, 0.0
      %v911 = vsel %vm851, %v880, 0.0
      %v912 = vlaneseq
      %v913 = vshrl.u32 %v912, 7
      %v914 = vsub.s32 0, %v913
      %v915 = vrot.slane %v766, %v914
      %v916 = vmul.f32 %v841, %v915
      %v917 = vmul.f32 %v793, %v915
      %v918 = vmul.f32 %v842, %v915
      %v919 = vmul.f32 %v796, %v915
      %v920 = vmul.f32 %v843, %v915
      %v921 = vmul.f32 %v799, %v915
      %v922 = vmul.f32 %v844, %v915
      %v923 = vmul.f32 %v802, %v915
      %v924 = vmul.f32 %v845, %v915
      %v925 = vmul.f32 %v805, %v915
      %v926 = vmul.f32 %v846, %v915
      %v927 = vmul.f32 %v808, %v915
      %v928 = vmul.f32 %v847, %v915
      %v929 = vmul.f32 %v811, %v915
      %v930 = vmul.f32 %v848, %v915
      %v931 = vmul.f32 %v814, %v915
      %v933 = vlaneseq
      %v934 = vshrl.u32 %v933, 7
      %v935 = vsub.s32 0, %v934
      %v936 = vrot.slane %v769, %v935
      %v938 = vadd.f32 %v916, %v936
      %v939 = vadd.f32 %v917, %v936
      %v940 = vadd.f32 %v918, %v936
      %v941 = vadd.f32 %v919, %v936
      %v942 = vadd.f32 %v920, %v936
      %v943 = vadd.f32 %v921, %v936
      %v944 = vadd.f32 %v922, %v936
      %v945 = vadd.f32 %v923, %v936
      %v946 = vadd.f32 %v924, %v936
      %v947 = vadd.f32 %v925, %v936
      %v948 = vadd.f32 %v926, %v936
      %v949 = vadd.f32 %v927, %v936
      %v950 = vadd.f32 %v928, %v936
      %v951 = vadd.f32 %v929, %v936
      %v952 = vadd.f32 %v930, %v936
      %v953 = vadd.f32 %v931, %v936
      %v954 = vlaneseq
      %v955 = vshrl.u32 %v954, 7
      %v956 = vsub.s32 1, %v955
      %v957 = vrot.slane %v766, %v956
      %v958 = vmul.f32 %v746, %v957
      %v959 = vmul.f32 %v747, %v957
      %v960 = vmul.f32 %v748, %v957
      %v961 = vmul.f32 %v749, %v957
      %v962 = vmul.f32 %v750, %v957
      %v963 = vmul.f32 %v751, %v957
      %v964 = vmul.f32 %v752, %v957
      %v965 = vmul.f32 %v753, %v957
      %v966 = vmul.f32 %v754, %v957
      %v967 = vmul.f32 %v755, %v957
      %v968 = vmul.f32 %v756, %v957
      %v969 = vmul.f32 %v757, %v957
      %v970 = vmul.f32 %v758, %v957
      %v971 = vmul.f32 %v759, %v957
      %v972 = vmul.f32 %v760, %v957
      %v973 = vmul.f32 %v761, %v957
      %v974 = vadd.f32 %v938, %v958
      %v975 = vadd.f32 %v939, %v959
      %v976 = vadd.f32 %v940, %v960
      %v977 = vadd.f32 %v941, %v961
      %v978 = vadd.f32 %v942, %v962
      %v979 = vadd.f32 %v943, %v963
      %v980 = vadd.f32 %v944, %v964
      %v981 = vadd.f32 %v945, %v965
      %v982 = vadd.f32 %v946, %v966
      %v983 = vadd.f32 %v947, %v967
      %v984 = vadd.f32 %v948, %v968
      %v985 = vadd.f32 %v949, %v969
      %v986 = vadd.f32 %v950, %v970
      %v987 = vadd.f32 %v951, %v971
      %v988 = vadd.f32 %v952, %v972
      %v989 = vadd.f32 %v953, %v973
      %v990 = vlaneseq
      %v991 = vshrl.u32 %v990, 7
      %v992 = vsub.s32 2, %v991
      %v993 = vrot.slane %v766, %v992
      %v994 = vmul.f32 %v854, %v993
      %v995 = vmul.f32 %v902, %v993
      %v996 = vmul.f32 %v857, %v993
      %v997 = vmul.f32 %v903, %v993
      %v998 = vmul.f32 %v860, %v993
      %v999 = vmul.f32 %v904, %v993
      %v1000 = vmul.f32 %v863, %v993
      %v1001 = vmul.f32 %v905, %v993
      %v1002 = vmul.f32 %v866, %v993
      %v1003 = vmul.f32 %v906, %v993
      %v1004 = vmul.f32 %v869, %v993
      %v1005 = vmul.f32 %v907, %v993
      %v1006 = vmul.f32 %v872, %v993
      %v1007 = vmul.f32 %v908, %v993
      %v1008 = vmul.f32 %v875, %v993
      %v1009 = vmul.f32 %v909, %v993
      %v1010 = vadd.f32 %v974, %v994
      %v1011 = vadd.f32 %v975, %v995
      %v1012 = vadd.f32 %v976, %v996
      %v1013 = vadd.f32 %v977, %v997
      %v1014 = vadd.f32 %v978, %v998
      %v1015 = vadd.f32 %v979, %v999
      %v1016 = vadd.f32 %v980, %v1000
      %v1017 = vadd.f32 %v981, %v1001
      %v1018 = vadd.f32 %v982, %v1002
      %v1019 = vadd.f32 %v983, %v1003
      %v1020 = vadd.f32 %v984, %v1004
      %v1021 = vadd.f32 %v985, %v1005
      %v1022 = vadd.f32 %v986, %v1006
      %v1023 = vadd.f32 %v987, %v1007
      %v1024 = vadd.f32 %v988, %v1008
      %v1025 = vadd.f32 %v989, %v1009
      %v1026 = vlaneseq
      %v1027 = vshrl.u32 %v1026, 7
      %v1028 = vsub.s32 0, %v1027
      %v1029 = vrot.slane %v767, %v1028
      %v1030 = vmul.f32 %v842, %v1029
      %v1031 = vmul.f32 %v796, %v1029
      %v1032 = vmul.f32 %v843, %v1029
      %v1033 = vmul.f32 %v799, %v1029
      %v1034 = vmul.f32 %v844, %v1029
      %v1035 = vmul.f32 %v802, %v1029
      %v1036 = vmul.f32 %v845, %v1029
      %v1037 = vmul.f32 %v805, %v1029
      %v1038 = vmul.f32 %v846, %v1029
      %v1039 = vmul.f32 %v808, %v1029
      %v1040 = vmul.f32 %v847, %v1029
      %v1041 = vmul.f32 %v811, %v1029
      %v1042 = vmul.f32 %v848, %v1029
      %v1043 = vmul.f32 %v814, %v1029
      %v1044 = vmul.f32 %v849, %v1029
      %v1045 = vmul.f32 %v817, %v1029
      %v1046 = vadd.f32 %v1010, %v1030
      %v1047 = vadd.f32 %v1011, %v1031
      %v1048 = vadd.f32 %v1012, %v1032
      %v1049 = vadd.f32 %v1013, %v1033
      %v1050 = vadd.f32 %v1014, %v1034
      %v1051 = vadd.f32 %v1015, %v1035
      %v1052 = vadd.f32 %v1016, %v1036
      %v1053 = vadd.f32 %v1017, %v1037
      %v1054 = vadd.f32 %v1018, %v1038
      %v1055 = vadd.f32 %v1019, %v1039
      %v1056 = vadd.f32 %v1020, %v1040
      %v1057 = vadd.f32 %v1021, %v1041
      %v1058 = vadd.f32 %v1022, %v1042
      %v1059 = vadd.f32 %v1023, %v1043
      %v1060 = vadd.f32 %v1024, %v1044
      %v1061 = vadd.f32 %v1025, %v1045
      %v1062 = vlaneseq
      %v1063 = vshrl.u32 %v1062, 7
      %v1064 = vsub.s32 1, %v1063
      %v1065 = vrot.slane %v767, %v1064
      %v1066 = vmul.f32 %v748, %v1065
      %v1067 = vmul.f32 %v749, %v1065
      %v1068 = vmul.f32 %v750, %v1065
      %v1069 = vmul.f32 %v751, %v1065
      %v1070 = vmul.f32 %v752, %v1065
      %v1071 = vmul.f32 %v753, %v1065
      %v1072 = vmul.f32 %v754, %v1065
      %v1073 = vmul.f32 %v755, %v1065
      %v1074 = vmul.f32 %v756, %v1065
      %v1075 = vmul.f32 %v757, %v1065
      %v1076 = vmul.f32 %v758, %v1065
      %v1077 = vmul.f32 %v759, %v1065
      %v1078 = vmul.f32 %v760, %v1065
      %v1079 = vmul.f32 %v761, %v1065
      %v1080 = vmul.f32 %v762, %v1065
      %v1081 = vmul.f32 %v763, %v1065
      %v1082 = vadd.f32 %v1046, %v1066
      %v1083 = vadd.f32 %v1047, %v1067
      %v1084 = vadd.f32 %v1048, %v1068
      %v1085 = vadd.f32 %v1049, %v1069
      %v1086 = vadd.f32 %v1050, %v1070
      %v1087 = vadd.f32 %v1051, %v1071
      %v1088 = vadd.f32 %v1052, %v1072
      %v1089 = vadd.f32 %v1053, %v1073
      %v1090 = vadd.f32 %v1054, %v1074
      %v1091 = vadd.f32 %v1055, %v1075
      %v1092 = vadd.f32 %v1056, %v1076
      %v1093 = vadd.f32 %v1057, %v1077
      %v1094 = vadd.f32 %v1058, %v1078
      %v1095 = vadd.f32 %v1059, %v1079
      %v1096 = vadd.f32 %v1060, %v1080
      %v1097 = vadd.f32 %v1061, %v1081
      %v1098 = vlaneseq
      %v1099 = vshrl.u32 %v1098, 7
      %v1100 = vsub.s32 2, %v1099
      %v1101 = vrot.slane %v767, %v1100
      %v1102 = vmul.f32 %v857, %v1101
      %v1103 = vmul.f32 %v903, %v1101
      %v1104 = vmul.f32 %v860, %v1101
      %v1105 = vmul.f32 %v904, %v1101
      %v1106 = vmul.f32 %v863, %v1101
      %v1107 = vmul.f32 %v905, %v1101
      %v1108 = vmul.f32 %v866, %v1101
      %v1109 = vmul.f32 %v906, %v1101
      %v1110 = vmul.f32 %v869, %v1101
      %v1111 = vmul.f32 %v907, %v1101
      %v1112 = vmul.f32 %v872, %v1101
      %v1113 = vmul.f32 %v908, %v1101
      %v1114 = vmul.f32 %v875, %v1101
      %v1115 = vmul.f32 %v909, %v1101
      %v1116 = vmul.f32 %v878, %v1101
      %v1117 = vmul.f32 %v910, %v1101
      %v1118 = vadd.f32 %v1082, %v1102
      %v1119 = vadd.f32 %v1083, %v1103
      %v1120 = vadd.f32 %v1084, %v1104
      %v1121 = vadd.f32 %v1085, %v1105
      %v1122 = vadd.f32 %v1086, %v1106
      %v1123 = vadd.f32 %v1087, %v1107
      %v1124 = vadd.f32 %v1088, %v1108
      %v1125 = vadd.f32 %v1089, %v1109
      %v1126 = vadd.f32 %v1090, %v1110
      %v1127 = vadd.f32 %v1091, %v1111
      %v1128 = vadd.f32 %v1092, %v1112
      %v1129 = vadd.f32 %v1093, %v1113
      %v1130 = vadd.f32 %v1094, %v1114
      %v1131 = vadd.f32 %v1095, %v1115
      %v1132 = vadd.f32 %v1096, %v1116
      %v1133 = vadd.f32 %v1097, %v1117
      %v1134 = vlaneseq
      %v1135 = vshrl.u32 %v1134, 7
      %v1136 = vsub.s32 0, %v1135
      %v1137 = vrot.slane %v768, %v1136
      %v1138 = vmul.f32 %v843, %v1137
      %v1139 = vmul.f32 %v799, %v1137
      %v1140 = vmul.f32 %v844, %v1137
      %v1141 = vmul.f32 %v802, %v1137
      %v1142 = vmul.f32 %v845, %v1137
      %v1143 = vmul.f32 %v805, %v1137
      %v1144 = vmul.f32 %v846, %v1137
      %v1145 = vmul.f32 %v808, %v1137
      %v1146 = vmul.f32 %v847, %v1137
      %v1147 = vmul.f32 %v811, %v1137
      %v1148 = vmul.f32 %v848, %v1137
      %v1149 = vmul.f32 %v814, %v1137
      %v1150 = vmul.f32 %v849, %v1137
      %v1151 = vmul.f32 %v817, %v1137
      %v1152 = vmul.f32 %v850, %v1137
      %v1153 = vmul.f32 %v820, %v1137
      %v1154 = vadd.f32 %v1118, %v1138
      %v1155 = vadd.f32 %v1119, %v1139
      %v1156 = vadd.f32 %v1120, %v1140
      %v1157 = vadd.f32 %v1121, %v1141
      %v1158 = vadd.f32 %v1122, %v1142
      %v1159 = vadd.f32 %v1123, %v1143
      %v1160 = vadd.f32 %v1124, %v1144
      %v1161 = vadd.f32 %v1125, %v1145
      %v1162 = vadd.f32 %v1126, %v1146
      %v1163 = vadd.f32 %v1127, %v1147
      %v1164 = vadd.f32 %v1128, %v1148
      %v1165 = vadd.f32 %v1129, %v1149
      %v1166 = vadd.f32 %v1130, %v1150
      %v1167 = vadd.f32 %v1131, %v1151
      %v1168 = vadd.f32 %v1132, %v1152
      %v1169 = vadd.f32 %v1133, %v1153
      %v1170 = vlaneseq
      %v1171 = vshrl.u32 %v1170, 7
      %v1172 = vsub.s32 1, %v1171
      %v1173 = vrot.slane %v768, %v1172
      %v1174 = vmul.f32 %v750, %v1173
      %v1175 = vmul.f32 %v751, %v1173
      %v1176 = vmul.f32 %v752, %v1173
      %v1177 = vmul.f32 %v753, %v1173
      %v1178 = vmul.f32 %v754, %v1173
      %v1179 = vmul.f32 %v755, %v1173
      %v1180 = vmul.f32 %v756, %v1173
      %v1181 = vmul.f32 %v757, %v1173
      %v1182 = vmul.f32 %v758, %v1173
      %v1183 = vmul.f32 %v759, %v1173
      %v1184 = vmul.f32 %v760, %v1173
      %v1185 = vmul.f32 %v761, %v1173
      %v1186 = vmul.f32 %v762, %v1173
      %v1187 = vmul.f32 %v763, %v1173
      %v1188 = vmul.f32 %v764, %v1173
      %v1189 = vmul.f32 %v765, %v1173
      %v1190 = vadd.f32 %v1154, %v1174
      %v1191 = vadd.f32 %v1155, %v1175
      %v1192 = vadd.f32 %v1156, %v1176
      %v1193 = vadd.f32 %v1157, %v1177
      %v1194 = vadd.f32 %v1158, %v1178
      %v1195 = vadd.f32 %v1159, %v1179
      %v1196 = vadd.f32 %v1160, %v1180
      %v1197 = vadd.f32 %v1161, %v1181
      %v1198 = vadd.f32 %v1162, %v1182
      %v1199 = vadd.f32 %v1163, %v1183
      %v1200 = vadd.f32 %v1164, %v1184
      %v1201 = vadd.f32 %v1165, %v1185
      %v1202 = vadd.f32 %v1166, %v1186
      %v1203 = vadd.f32 %v1167, %v1187
      %v1204 = vadd.f32 %v1168, %v1188
      %v1205 = vadd.f32 %v1169, %v1189
      %v1206 = vlaneseq
      %v1207 = vshrl.u32 %v1206, 7
      %v1208 = vsub.s32 2, %v1207
      %v1209 = vrot.slane %v768, %v1208
      %v1210 = vmul.f32 %v860, %v1209
      %v1211 = vmul.f32 %v904, %v1209
      %v1212 = vmul.f32 %v863, %v1209
      %v1213 = vmul.f32 %v905, %v1209
      %v1214 = vmul.f32 %v866, %v1209
      %v1215 = vmul.f32 %v906, %v1209
      %v1216 = vmul.f32 %v869, %v1209
      %v1217 = vmul.f32 %v907, %v1209
      %v1218 = vmul.f32 %v872, %v1209
      %v1219 = vmul.f32 %v908, %v1209
      %v1220 = vmul.f32 %v875, %v1209
      %v1221 = vmul.f32 %v909, %v1209
      %v1222 = vmul.f32 %v878, %v1209
      %v1223 = vmul.f32 %v910, %v1209
      %v1224 = vmul.f32 %v881, %v1209
      %v1225 = vmul.f32 %v911, %v1209
      %v1226 = vadd.f32 %v1190, %v1210
      %v1227 = vadd.f32 %v1191, %v1211
      %v1228 = vadd.f32 %v1192, %v1212
      %v1229 = vadd.f32 %v1193, %v1213
      %v1230 = vadd.f32 %v1194, %v1214
      %v1231 = vadd.f32 %v1195, %v1215
      %v1232 = vadd.f32 %v1196, %v1216
      %v1233 = vadd.f32 %v1197, %v1217
      %v1234 = vadd.f32 %v1198, %v1218
      %v1235 = vadd.f32 %v1199, %v1219
      %v1236 = vadd.f32 %v1200, %v1220
      %v1237 = vadd.f32 %v1201, %v1221
      %v1238 = vadd.f32 %v1202, %v1222
      %v1239 = vadd.f32 %v1203, %v1223
      %v1240 = vadd.f32 %v1204, %v1224
      %v1241 = vadd.f32 %v1205, %v1225
      %vm1242 = vcmp.ge.f32.partialorder %v1226, 0.0
      %vm1243 = vcmp.ge.f32.partialorder %v1227, 0.0
      %vm1244 = vcmp.ge.f32.partialorder %v1228, 0.0
      %vm1245 = vcmp.ge.f32.partialorder %v1229, 0.0
      %vm1246 = vcmp.ge.f32.partialorder %v1230, 0.0
      %vm1247 = vcmp.ge.f32.partialorder %v1231, 0.0
      %vm1248 = vcmp.ge.f32.partialorder %v1232, 0.0
      %vm1249 = vcmp.ge.f32.partialorder %v1233, 0.0
      %vm1250 = vcmp.ge.f32.partialorder %v1234, 0.0
      %vm1251 = vcmp.ge.f32.partialorder %v1235, 0.0
      %vm1252 = vcmp.ge.f32.partialorder %v1236, 0.0
      %vm1253 = vcmp.ge.f32.partialorder %v1237, 0.0
      %vm1254 = vcmp.ge.f32.partialorder %v1238, 0.0
      %vm1255 = vcmp.ge.f32.partialorder %v1239, 0.0
      %vm1256 = vcmp.ge.f32.partialorder %v1240, 0.0
      %vm1257 = vcmp.ge.f32.partialorder %v1241, 0.0
      %v1258 = vld [vmem:[%s6] sm:$0x1]
      %v1260 = vlaneseq
      %v1261 = vshrl.u32 %v1260, 7
      %v1262 = vsub.s32 0, %v1261
      %v1263 = vrot.slane %v1258, %v1262
      %v1265 = vmul.f32 %v1263, %v1226
      %v1266 = vmul.f32 %v1263, %v1227
      %v1267 = vmul.f32 %v1263, %v1228
      %v1268 = vmul.f32 %v1263, %v1229
      %v1269 = vmul.f32 %v1263, %v1230
      %v1270 = vmul.f32 %v1263, %v1231
      %v1271 = vmul.f32 %v1263, %v1232
      %v1272 = vmul.f32 %v1263, %v1233
      %v1273 = vmul.f32 %v1263, %v1234
      %v1274 = vmul.f32 %v1263, %v1235
      %v1275 = vmul.f32 %v1263, %v1236
      %v1276 = vmul.f32 %v1263, %v1237
      %v1277 = vmul.f32 %v1263, %v1238
      %v1278 = vmul.f32 %v1263, %v1239
      %v1279 = vmul.f32 %v1263, %v1240
      %v1280 = vmul.f32 %v1263, %v1241
      %v1281 = vsel %vm1242, %v1226, %v1265
      %v1282 = vsel %vm1243, %v1227, %v1266
      %v1283 = vsel %vm1244, %v1228, %v1267
      %v1284 = vsel %vm1245, %v1229, %v1268
      %v1285 = vsel %vm1246, %v1230, %v1269
      %v1286 = vsel %vm1247, %v1231, %v1270
      %v1287 = vsel %vm1248, %v1232, %v1271
      %v1288 = vsel %vm1249, %v1233, %v1272
      %v1289 = vsel %vm1250, %v1234, %v1273
      %v1290 = vsel %vm1251, %v1235, %v1274
      %v1291 = vsel %vm1252, %v1236, %v1275
      %v1292 = vsel %vm1253, %v1237, %v1276
      %v1293 = vsel %vm1254, %v1238, %v1277
      %v1294 = vsel %vm1255, %v1239, %v1278
      %v1295 = vsel %vm1256, %v1240, %v1279
      %v1296 = vsel %vm1257, %v1241, %v1280
      %v1297 = vld [vmem:[%s7] sm:$0xff]
      %v1298 = vld [vmem:[%s8] sm:$0x1]
      %v1300 = vlaneseq
      %v1301 = vshrl.u32 %v1300, 7
      %v1302 = vsub.s32 0, %v1301
      %v1303 = vrot.slane %v1298, %v1302
      %vm1305 = vcmask 64512
      %v1307 = vsel %vm1305, %v1281, 0
      %v1310 = vsel %vm1305, %v1282, 0
      %v1313 = vsel %vm1305, %v1283, 0
      %v1316 = vsel %vm1305, %v1284, 0
      %v1319 = vsel %vm1305, %v1285, 0
      %v1322 = vsel %vm1305, %v1286, 0
      %v1325 = vsel %vm1305, %v1287, 0
      %v1328 = vsel %vm1305, %v1288, 0
      %v1331 = vsel %vm1305, %v1289, 0
      %v1334 = vsel %vm1305, %v1290, 0
      %v1337 = vsel %vm1305, %v1291, 0
      %v1340 = vsel %vm1305, %v1292, 0
      %v1343 = vsel %vm1305, %v1293, 0
      %v1346 = vsel %vm1305, %v1294, 0
      %v1349 = vsel %vm1305, %v1295, 0
      %v1352 = vsel %vm1305, %v1296, 0
      %1354 = vmatprep.subr.mxu0 0.0
      %1355 = vmatpush1.msra.mxu0 %v1297
      %1356 = vmatprep.subr.mxu0 0.0
      %1357 = vmatpush1.msra.mxu0 0.0
      %1358 = vmatprep.subr.mxu0 0.0
      %1359 = vmatpush1.msra.mxu0 0.0
      %1360 = vmatprep.subr.mxu0 0.0
      %1361 = vmatpush1.msra.mxu0 0.0
      %1362 = vmatprep.subr.mxu0 0.0
      %1363 = vmatpush1.msra.mxu0 0.0
      %1364 = vmatprep.subr.mxu0 0.0
      %1365 = vmatpush1.msra.mxu0 0.0
      %1366 = vmatprep.subr.mxu0 0.0
      %1367 = vmatpush1.msra.mxu0 0.0
      %1368 = vmatprep.subr.mxu0 0.0
      %1369 = vmatpush1.msra.mxu0 0.0
      %1370 = vmatprep.subr.mxu0 0.0
      %1371 = vmatpush1.msra.mxu0 0.0
      %1372 = vmatprep.subr.mxu0 0.0
      %1373 = vmatpush1.msra.mxu0 0.0
      %1374 = vmatprep.subr.mxu0 0.0
      %1375 = vmatpush1.msra.mxu0 0.0
      %1376 = vmatprep.subr.mxu0 0.0
      %1377 = vmatpush1.msra.mxu0 0.0
      %1378 = vmatprep.subr.mxu0 0.0
      %1379 = vmatpush1.msra.mxu0 0.0
      %1380 = vmatprep.subr.mxu0 0.0
      %1381 = vmatpush1.msra.mxu0 0.0
      %1382 = vmatprep.subr.mxu0 0.0
      %1383 = vmatpush1.msra.mxu0 0.0
      %1384 = vmatprep.subr.mxu0 0.0
      %1385 = vmatpush1.msra.mxu0 0.0
      %1386 = vmatprep.subr.mxu0 0.0
      %1387 = vmatpush1.msra.mxu0 0.0
      %1388 = vmatprep.subr.mxu0 0.0
      %1389 = vmatpush1.msra.mxu0 0.0
      %1390 = vmatprep.subr.mxu0 0.0
      %1391 = vmatpush1.msra.mxu0 0.0
      %1392 = vmatprep.subr.mxu0 0.0
      %1393 = vmatpush1.msra.mxu0 0.0
      %1394 = vmatprep.subr.mxu0 0.0
      %1395 = vmatpush1.msra.mxu0 0.0
      %1396 = vmatprep.subr.mxu0 0.0
      %1397 = vmatpush1.msra.mxu0 0.0
      %1398 = vmatprep.subr.mxu0 0.0
      %1399 = vmatpush1.msra.mxu0 0.0
      %1400 = vmatprep.subr.mxu0 0.0
      %1401 = vmatpush1.msra.mxu0 0.0
      %1402 = vmatprep.subr.mxu0 0.0
      %1403 = vmatpush1.msra.mxu0 0.0
      %1404 = vmatprep.subr.mxu0 0.0
      %1405 = vmatpush1.msra.mxu0 0.0
      %1406 = vmatprep.subr.mxu0 0.0
      %1407 = vmatpush1.msra.mxu0 0.0
      %1408 = vmatprep.subr.mxu0 0.0
      %1409 = vmatpush1.msra.mxu0 0.0
      %1410 = vmatprep.subr.mxu0 0.0
      %1411 = vmatpush1.msra.mxu0 0.0
      %1412 = vmatprep.subr.mxu0 0.0
      %1413 = vmatpush1.msra.mxu0 0.0
      %1414 = vmatprep.subr.mxu0 0.0
      %1415 = vmatpush1.msra.mxu0 0.0
      %1416 = vmatprep.subr.mxu0 0.0
      %1417 = vmatpush1.msra.mxu0 0.0
      %1418 = vmatprep.mubr.f32.mxu0 0.0
      %1419 = vmatmul.mubr.f32.gmra.mrb[0].mxu0 %v1307
      %v1420 = vpop.f32.mrb[0].mxu0
      %v1421 = vadd.f32 %v1303, %v1420
      %v1422 = vpop.f32.mrb[0].mxu0
      %1423 = vmatprep.mubr.f32.mxu0 0.0
      %1424 = vmatmul.mubr.f32.gmra.mrb[0].mxu0 %v1310
      %v1425 = vpop.f32.mrb[0].mxu0
      %v1426 = vadd.f32 %v1303, %v1425
      %v1427 = vpop.f32.mrb[0].mxu0
      %1428 = vmatprep.mubr.f32.mxu0 0.0
      %1429 = vmatmul.mubr.f32.gmra.mrb[0].mxu0 %v1313
      %v1430 = vpop.f32.mrb[0].mxu0
      %v1431 = vadd.f32 %v1303, %v1430
      %v1432 = vpop.f32.mrb[0].mxu0
      %1433 = vmatprep.mubr.f32.mxu0 0.0
      %1434 = vmatmul.mubr.f32.gmra.mrb[0].mxu0 %v1316
      %v1435 = vpop.f32.mrb[0].mxu0
      %v1436 = vadd.f32 %v1303, %v1435
      %v1437 = vpop.f32.mrb[0].mxu0
      %1438 = vmatprep.mubr.f32.mxu0 0.0
      %1439 = vmatmul.mubr.f32.gmra.mrb[0].mxu0 %v1319
      %v1440 = vpop.f32.mrb[0].mxu0
      %v1441 = vadd.f32 %v1303, %v1440
      %v1442 = vpop.f32.mrb[0].mxu0
      %1443 = vmatprep.mubr.f32.mxu0 0.0
      %1444 = vmatmul.mubr.f32.gmra.mrb[0].mxu0 %v1322
      %v1445 = vpop.f32.mrb[0].mxu0
      %v1446 = vadd.f32 %v1303, %v1445
      %v1447 = vpop.f32.mrb[0].mxu0
      %1448 = vmatprep.mubr.f32.mxu0 0.0
      %1449 = vmatmul.mubr.f32.gmra.mrb[0].mxu0 %v1325
      %v1450 = vpop.f32.mrb[0].mxu0
      %v1451 = vadd.f32 %v1303, %v1450
      %v1452 = vpop.f32.mrb[0].mxu0
      %1453 = vmatprep.mubr.f32.mxu0 0.0
      %1454 = vmatmul.mubr.f32.gmra.mrb[0].mxu0 %v1328
      %v1455 = vpop.f32.mrb[0].mxu0
      %v1456 = vadd.f32 %v1303, %v1455
      %v1457 = vpop.f32.mrb[0].mxu0
      %1458 = vmatprep.mubr.f32.mxu0 0.0
      %1459 = vmatmul.mubr.f32.gmra.mrb[0].mxu0 %v1331
      %v1460 = vpop.f32.mrb[0].mxu0
      %v1461 = vadd.f32 %v1303, %v1460
      %v1462 = vpop.f32.mrb[0].mxu0
      %1463 = vmatprep.mubr.f32.mxu0 0.0
      %1464 = vmatmul.mubr.f32.gmra.mrb[0].mxu0 %v1334
      %v1465 = vpop.f32.mrb[0].mxu0
      %v1466 = vadd.f32 %v1303, %v1465
      %v1467 = vpop.f32.mrb[0].mxu0
      %1468 = vmatprep.mubr.f32.mxu0 0.0
      %1469 = vmatmul.mubr.f32.gmra.mrb[0].mxu0 %v1337
      %v1470 = vpop.f32.mrb[0].mxu0
      %v1471 = vadd.f32 %v1303, %v1470
      %v1472 = vpop.f32.mrb[0].mxu0
      %1473 = vmatprep.mubr.f32.mxu0 0.0
      %1474 = vmatmul.mubr.f32.gmra.mrb[0].mxu0 %v1340
      %v1475 = vpop.f32.mrb[0].mxu0
      %v1476 = vadd.f32 %v1303, %v1475
      %v1477 = vpop.f32.mrb[0].mxu0
      %1478 = vmatprep.mubr.f32.mxu0 0.0
      %1479 = vmatmul.mubr.f32.gmra.mrb[0].mxu0 %v1343
      %v1480 = vpop.f32.mrb[0].mxu0
      %v1481 = vadd.f32 %v1303, %v1480
      %v1482 = vpop.f32.mrb[0].mxu0
      %1483 = vmatprep.mubr.f32.mxu0 0.0
      %1484 = vmatmul.mubr.f32.gmra.mrb[0].mxu0 %v1346
      %v1485 = vpop.f32.mrb[0].mxu0
      %v1486 = vadd.f32 %v1303, %v1485
      %v1487 = vpop.f32.mrb[0].mxu0
      %1488 = vmatprep.mubr.f32.mxu0 0.0
      %1489 = vmatmul.mubr.f32.gmra.mrb[0].mxu0 %v1349
      %v1490 = vpop.f32.mrb[0].mxu0
      %v1491 = vadd.f32 %v1303, %v1490
      %v1492 = vpop.f32.mrb[0].mxu0
      %1493 = vmatprep.mubr.f32.mxu0 0.0
      %1494 = vmatmul.mubr.f32.gmra.mrb[0].mxu0 %v1352
      %v1495 = vpop.f32.mrb[0].mxu0
      %v1496 = vadd.f32 %v1303, %v1495
      %v1497 = vpop.f32.mrb[0].mxu0
      %1498 = vdwg.mxu0
      %v1499 = vadd.f32 %v1421, %v363
      %v1500 = vadd.f32 %v1426, %v364
      %v1501 = vadd.f32 %v1431, %v365
      %v1502 = vadd.f32 %v1436, %v366
      %v1503 = vadd.f32 %v1441, %v367
      %v1504 = vadd.f32 %v1446, %v368
      %v1505 = vadd.f32 %v1451, %v369
      %v1506 = vadd.f32 %v1456, %v370
      %v1507 = vadd.f32 %v1461, %v371
      %v1508 = vadd.f32 %v1466, %v372
      %v1509 = vadd.f32 %v1471, %v373
      %v1510 = vadd.f32 %v1476, %v374
      %v1511 = vadd.f32 %v1481, %v375
      %v1512 = vadd.f32 %v1486, %v376
      %v1513 = vadd.f32 %v1491, %v377
      %v1514 = vadd.f32 %v1496, %v378
      %1515 = vst.msk [vmem:[%s356] sm:$0xff] %vm389, %v1499
      %1516 = vst.msk [vmem:[%s356 + $0x8] sm:$0xff] %vm389, %v1500
      %1517 = vst.msk [vmem:[%s356 + $0x10] sm:$0xff] %vm389, %v1501
      %1518 = vst.msk [vmem:[%s356 + $0x18] sm:$0xff] %vm389, %v1502
      %1519 = vst.msk [vmem:[%s356 + $0x20] sm:$0xff] %vm389, %v1503
      %1520 = vst.msk [vmem:[%s356 + $0x28] sm:$0xff] %vm389, %v1504
      %1521 = vst.msk [vmem:[%s356 + $0x30] sm:$0xff] %vm389, %v1505
      %1522 = vst.msk [vmem:[%s356 + $0x38] sm:$0xff] %vm389, %v1506
      %1523 = vst.msk [vmem:[%s356 + $0x40] sm:$0xff] %vm389, %v1507
      %1524 = vst.msk [vmem:[%s356 + $0x48] sm:$0xff] %vm389, %v1508
      %1525 = vst.msk [vmem:[%s356 + $0x50] sm:$0xff] %vm389, %v1509
      %1526 = vst.msk [vmem:[%s356 + $0x58] sm:$0xff] %vm389, %v1510
      %1527 = vst.msk [vmem:[%s356 + $0x60] sm:$0xff] %vm389, %v1511
      %1528 = vst.msk [vmem:[%s356 + $0x68] sm:$0xff] %vm389, %v1512
      %1529 = vst.msk [vmem:[%s356 + $0x70] sm:$0xff] %vm389, %v1513
      %1530 = vst.msk [vmem:[%s356 + $0x78] sm:$0xff] %vm389, %v1514
      %s1531 = smul.u32 8, %s25
      %p1532 = scmp.lt.s32.totalorder %s24, 1
      %s1533 = scalar_select %p1532, %s24, 1
      %p1534 = scmp.lt.s32.totalorder %s1531, 15
      %s1535 = scalar_select %p1534, %s1531, 15
      %s1536 = smul.addr %s1535, 2
      %s1537 = smul.addr %s1533, 32
      %s1538 = sadd.s32 %s1536, %s1537
      %s1539 = smul.addr %s1538, 8
      %s1540 = scalar_lea.vmem %s9, %s1539
      // Predicated region
      $region57: #{bottleneck_forward.1} parent=55 // pred_check
        %p1541 = pneg %p246
      $region58: #{bottleneck_forward.1} parent=55 // pred_check_branch
        %1543 = sbr.rel (%p1541) target = $region60
      $region59: #{bottleneck_forward.1} parent=55 // pred_region
        %s1544 = smul.u32 8, %s25
      $region60: #{bottleneck_forward.1} parent=55 // pred_fallthru
        _
    $region56: #{bottleneck_forward.1} parent=5 // pred_fallthru
      _
    %p1545 = scmp.le.s32.totalorder 2, %s15
    // Predicated region
    $region61: #{bottleneck_forward.1} parent=5 // pred_check
      %p1546 = pneg %p1545
    $region62: #{bottleneck_forward.1} parent=5 // pred_check_branch
      %1548 = sbr.rel (%p1546) target = $region64
    $region63: #{bottleneck_forward.1} parent=5 // pred_region
      %s1549 = ssub.s32 %s15, 2
      // Predicated region
      $region65: #{bottleneck_forward.1} parent=63 // pred_check
        %p1550 = pneg %p252
      $region66: #{bottleneck_forward.1} parent=63 // pred_check_branch
        %1552 = sbr.rel (%p1550) target = $region68
      $region67: #{bottleneck_forward.1} parent=63 // pred_region
        %s1553 = smul.u32 8, %s27
        %p1554 = scmp.lt.s32.totalorder %s26, 1
        %s1555 = scalar_select %p1554, %s26, 1
        %p1556 = scmp.lt.s32.totalorder %s1553, 15
        %s1557 = scalar_select %p1556, %s1553, 15
        %s1558 = smul.addr %s1557, 2
        %s1559 = smul.addr %s1555, 32
        %s1560 = sadd.s32 %s1558, %s1559
        %s1561 = smul.addr %s1560, 8
        %s1562 = scalar_lea.vmem %s9, %s1561
      $region68: #{bottleneck_forward.1} parent=63 // pred_fallthru
        _
    $region64: #{bottleneck_forward.1} parent=5 // pred_fallthru
      _
  $region6: #{bottleneck_forward.1} parent=0 // loop_footer
    %s19 = sadd.s32 1, %s15
  $region7: #{bottleneck_forward.1} parent=0 // loop_footer_branch
    %14 = sbr.rel target = $region3
  $region8: #{bottleneck_forward.1} parent=0 // loop_exit
    _

</llo_original>
